<compile_context>
chip_gen: v7x
topology: tpu7x:2x2x1
jax: 0.10.0
libtpu: 0.0.40
codegen_flags: <defaults>
</compile_context>

<pallas_src>
import functools
import math

import jax
import jax.numpy as jnp
from jax.experimental import pallas as pl
from jax.experimental.pallas import tpu as pltpu


def _column_views(slab, d, W):
    """3 column-shifted views of the slab for column offsets (-d, 0, +d).

    slab: (C, S*W) f32, image rows flattened onto the lane axis.  The +-d views are built with
    pltpu.roll (XLU) and have their per-row wrap-around columns zeroed once, so every later
    row-offset tap is just a static W-aligned slice of one of these three arrays.
    """
    n = slab.shape[-1]
    lane = jax.lax.broadcasted_iota(jnp.int32, (1, n), 1)
    col = lane % W                 # W is a static Python int; power-of-two W folds to an AND
    view_m = pltpu.roll(slab, d, axis=1)          # view_m[:, i] = slab[:, i - d]  (dc = -d)
    view_m = jnp.where(col >= d, view_m, 0.0)
    view_p = pltpu.roll(slab, n - d, axis=1)      # view_p[:, i] = slab[:, i + d]  (dc = +d)
    view_p = jnp.where(col < W - d, view_p, 0.0)
    return view_m, slab, view_p


def _row_masks(blk_lanes, d, W):
    """Row-boundary validity masks for taps shifted by -d / +d rows.

    Only the first / last row block can read out-of-image (or wrongly-clamped halo) rows, so the
    masks are (hb > 0) | (lane >= d*W) and (hb < last) | (lane < blk - d*W): a single lane iota,
    no integer div/mod.
    """
    hb = pl.program_id(1)
    n_hb = pl.num_programs(1)
    lane = jax.lax.broadcasted_iota(jnp.int32, (1, blk_lanes), 1)
    top_ok = jnp.logical_or(hb > 0, lane >= d * W)
    bot_ok = jnp.logical_or(hb < n_hb - 1, lane < blk_lanes - d * W)
    return top_ok, bot_ok


def _filter_kernel(xt_ref, xc_ref, xb_ref, *rest, dil, blk_rows, W, halo_rows):
    """Dynamic dilated 3x3 local filtering for one (batch, row-block) tile.

    xt/xc/xb : (1, C, halo*W), (1, C, blk*W), (1, C, halo*W) row slabs of x (clamped halos).
    rest     : nine (1, C, blk*W) y refs (tap k = ki*3 + kj), the (1, C, blk*W) output ref, and
               a (C, (blk + 2*halo)*W) f32 VMEM scratch slab.
    """
    y_refs, o_ref, slab_ref = rest[:9], rest[9], rest[10]
    C = xc_ref.shape[1]
    blk_lanes = blk_rows * W
    hW = halo_rows * W

    # Assemble the (halo | block | halo) slab once into persistent VMEM scratch (f32).
    slab_ref[:, :hW] = xt_ref[0].astype(jnp.float32)
    slab_ref[:, hW:hW + blk_lanes] = xc_ref[0].astype(jnp.float32)
    slab_ref[:, hW + blk_lanes:] = xb_ref[0].astype(jnp.float32)
    views = _column_views(slab_ref[...], dil, W)

    top_ok, bot_ok = _row_masks(blk_lanes, dil, W)

    acc = jnp.zeros((C, blk_lanes), jnp.float32)
    for g, dr in enumerate((-dil, 0, dil)):               # kernel row offset (ki = g)
        start = (halo_rows + dr) * W
        part = jnp.zeros((C, blk_lanes), jnp.float32)
        for j in range(3):                                 # kernel col offset (kj = j)
            tap = views[j][:, start:start + blk_lanes]
            part = part + tap * y_refs[3 * g + j][0].astype(jnp.float32)
        if dr < 0:
            part = jnp.where(top_ok, part, 0.0)
        elif dr > 0:
            part = jnp.where(bot_ok, part, 0.0)
        acc = acc + part
    o_ref[0] = acc.astype(o_ref.dtype)


def _fuse_kernel(it_ref, ic_ref, ib_ref, w_ref, b_ref, o_ref, slab_ref, *,
                 blk_rows, W, halo_rows):
    """3x3 conv (Cin->Cout, pad 1) + bias + LeakyReLU(0.2) for one (batch, row-block) tile.

    it/ic/ib : halo / main / halo slabs of the filtered intermediate (same layout as x above).
    w_ref    : (9, Cout, Cin)   b_ref : (Cout, 1)   o_ref : (1, Cout, blk*W)
    slab_ref : (Cin, (blk + 2*halo)*W) f32 VMEM scratch.
    """
    blk_lanes = blk_rows * W
    hW = halo_rows * W

    slab_ref[:, :hW] = it_ref[0].astype(jnp.float32)
    slab_ref[:, hW:hW + blk_lanes] = ic_ref[0].astype(jnp.float32)
    slab_ref[:, hW + blk_lanes:] = ib_ref[0].astype(jnp.float32)
    views = _column_views(slab_ref[...], 1, W)

    top_ok, bot_ok = _row_masks(blk_lanes, 1, W)

    w = w_ref[...].astype(jnp.float32)                     # (9, Cout, Cin)
    C_out = w.shape[1]
    acc = jnp.zeros((C_out, blk_lanes), jnp.float32)
    for g, dr in enumerate((-1, 0, 1)):
        start = (halo_rows + dr) * W
        part = jnp.zeros((C_out, blk_lanes), jnp.float32)
        for j in range(3):
            tap = views[j][:, start:start + blk_lanes]
            # Channel mixing on the MXU: (Cout, Cin) @ (Cin, blk*W), f32 accumulate.
            part = part + jnp.dot(w[3 * g + j], tap, preferred_element_type=jnp.float32)
        if dr < 0:
            part = jnp.where(top_ok, part, 0.0)
        elif dr > 0:
            part = jnp.where(bot_ok, part, 0.0)
        acc = acc + part
    out = acc + b_ref[...].astype(jnp.float32)
    out = jnp.where(out >= 0, out, 0.2 * out)              # LeakyReLU(negative_slope=0.2)
    o_ref[0] = out.astype(o_ref.dtype)


def _vmem_limit_bytes():
    """Per-generation scoped-VMEM request: capacity minus 16 MiB headroom, capped at 100 MiB.
    v7x (64 MiB / TC) -> ~48 MiB; v5e/v6e (128 MiB) -> 100 MiB; unknown -> 48 MiB."""
    try:
        cap = int(pltpu.get_tpu_info().vmem_capacity_bytes)
    except Exception:
        cap = 64 * 1024 * 1024
    return int(min(max(cap - 16 * 1024 * 1024, 16 * 1024 * 1024), 100 * 1024 * 1024))


def _stage1_vmem_bytes(C, W, blk, hr, in_bytes, out_bytes):
    """Rough per-step VMEM footprint of the filtering stage (the larger of the two stages)."""
    slab = (blk + 2 * hr) * W * C
    block = blk * W * C
    dma = 2 * (slab * in_bytes + 9 * block * in_bytes + block * out_bytes)   # double-buffered
    scratch = slab * 4                                                       # f32 assembly slab
    temps = 2 * slab * 4 + 3 * block * 4                                     # rolled views + acc
    return dma + scratch + temps + (2 << 20)


def _row_tiling(H, W, dil, block_rows, C, elem_bytes, vmem_budget):
    """Pick (block_rows, halo_rows): halo*W and block*W 128-lane aligned, halo | block | H, and
    (unless block_rows is forced) the LARGEST block whose stage-1 footprint fits the budget."""
    base = 128 // math.gcd(W, 128)               # min rows giving a 128-aligned lane footprint
    hr_min = base * (-(-(dil + 1) // base))      # halo rows: multiple of base, >= dil + 1
    for hr in range(hr_min, H + 1, base):
        cand = [t for t in range(hr, H + 1, hr) if H % t == 0]
        if not cand:
            continue
        if block_rows is not None:
            if block_rows in cand:
                return block_rows, hr
            continue
        fits = [t for t in cand
                if _stage1_vmem_bytes(C, W, t, hr, elem_bytes, elem_bytes) <= vmem_budget]
        return (fits[-1] if fits else cand[0]), hr
    if block_rows not in (None, H):
        raise ValueError(f"unsupported block_rows={block_rows} for H={H}, W={W}, dilation={dil}")
    return H, H                                  # fallback: whole image per step (full blocks)


def depthdc_forward(x, y, fuse_w, fuse_b, kernel_size, *,
                    block_rows=None, compute_dtype=jnp.bfloat16):
    """DepthDC.forward.  x: (N,C,H,W), y: (N,C*9,H,W), fuse_w: (C,C,3,3), fuse_b: (C,) -> NCHW f32.

    compute_dtype is the HBM streaming dtype for x / y / the filtered intermediate (accumulation
    is always f32 in-register).  bfloat16 halves the traffic of this HBM-bound op; pass
    jnp.float32 for a bit-faithful (slower) path.
    """
    N, C, H, W = x.shape
    d = int(kernel_size)
    assert y.shape == (N, C * 9, H, W)
    assert 0 < d < min(H, W)
    L = H * W

    vmem_limit = _vmem_limit_bytes()
    elem_bytes = jnp.dtype(compute_dtype).itemsize
    TH, hr = _row_tiling(H, W, d, block_rows, C, elem_bytes, int(0.8 * vmem_limit))
    n_hb = H // TH
    rpb = TH // hr                      # halo-sized row groups per block
    nhalo = H // hr
    slab_lanes = (TH + 2 * hr) * W

    # Free (contiguous) reshapes only -- no pads / transposes of the big tensors in HBM.
    x2 = x.reshape(N, C, L).astype(compute_dtype)
    y2 = y.reshape(N, C, 9 * L).astype(compute_dtype)      # [n, c, k*L + h*W + w]
    w9 = jnp.transpose(fuse_w, (2, 3, 0, 1)).reshape(9, C, C).astype(jnp.float32)
    b2 = fuse_b.reshape(C, 1).astype(jnp.float32)

    # NOTE: for C < 8 the sublane axis is under-filled; packing 8//C batch images per step would
    # fill the vregs, but needs block-diagonal fuse weights -- not done here.
    main_spec = pl.BlockSpec((1, C, TH * W), lambda n, hb: (n, 0, hb))
    top_spec = pl.BlockSpec((1, C, hr * W),
                            lambda n, hb: (n, 0, jnp.maximum(hb * rpb - 1, 0)))
    bot_spec = pl.BlockSpec((1, C, hr * W),
                            lambda n, hb: (n, 0, jnp.minimum((hb + 1) * rpb, nhalo - 1)))
    y_specs = [pl.BlockSpec((1, C, TH * W), lambda n, hb, kk=k: (n, 0, kk * n_hb + hb))
               for k in range(9)]

    params = pltpu.CompilerParams(
        dimension_semantics=("parallel", "parallel"),   # batch-first grid; megacore / 2-TC friendly
        vmem_limit_bytes=vmem_limit)

    # Stage 1: inter[n,c,p] = sum_k unfold_d(x)[n,c,k,p] * y[n,c,k,p]  (dilated 3x3, zero pad).
    # The intermediate is streamed as compute_dtype (bf16 by default) to halve its HBM round trip.
    # TODO(synk): fully fusing stage 2 here (recompute one filtered halo row per side) would drop
    # the intermediate entirely but needs y halos / a carried-row pipeline; not done.
    inter = pl.pallas_call(
        functools.partial(_filter_kernel, dil=d, blk_rows=TH, W=W, halo_rows=hr),
        out_shape=jax.ShapeDtypeStruct((N, C, L), compute_dtype),
        grid=(N, n_hb),
        in_specs=[top_spec, main_spec, bot_spec] + y_specs,
        out_specs=main_spec,
        scratch_shapes=[pltpu.VMEM((C, slab_lanes), jnp.float32)],
        compiler_params=params,
    )(x2, x2, x2, *([y2] * 9))

    # Stage 2: LeakyReLU(Conv2d(C, C, 3, 1, 1)(inter)).
    out2 = pl.pallas_call(
        functools.partial(_fuse_kernel, blk_rows=TH, W=W, halo_rows=hr),
        out_shape=jax.ShapeDtypeStruct((N, C, L), jnp.float32),
        grid=(N, n_hb),
        in_specs=[top_spec, main_spec, bot_spec,
                  pl.BlockSpec((9, C, C), lambda n, hb: (0, 0, 0)),
                  pl.BlockSpec((C, 1), lambda n, hb: (0, 0))],
        out_specs=main_spec,
        scratch_shapes=[pltpu.VMEM((C, slab_lanes), jnp.float32)],
        compiler_params=params,
    )(inter, inter, inter, w9, b2)

    return out2.reshape(N, C, H, W)


def depthdc_reference(x, y, fuse_w, fuse_b, kernel_size):
    """Pure-JAX reference (NCHW), mirrors the PyTorch DepthDC module exactly."""
    N, C, H, W = x.shape
    d = kernel_size
    xp = jnp.pad(x, ((0, 0), (0, 0), (d, d), (d, d)))
    ker = y.reshape(N, C, 9, H, W)
    out = jnp.zeros((N, C, H, W), jnp.float32)
    for ki in range(3):
        for kj in range(3):
            tap = xp[:, :, ki * d:ki * d + H, kj * d:kj * d + W]
            out = out + tap * ker[:, :, ki * 3 + kj]
    outp = jnp.pad(out, ((0, 0), (0, 0), (1, 1), (1, 1)))
    conv = jnp.zeros((N, C, H, W), jnp.float32)
    for ki in range(3):
        for kj in range(3):
            sl = outp[:, :, ki:ki + H, kj:kj + W]
            conv = conv + jnp.einsum('nihw,oi->nohw', sl, fuse_w[:, :, ki, kj],
                                     precision=jax.lax.Precision.HIGHEST)
    conv = conv + fuse_b[None, :, None, None]
    return jnp.where(conv >= 0, conv, 0.2 * conv)


if __name__ == "__main__":
    N, C, H, W = 2, 4, 16, 16

    key = jax.random.PRNGKey(0)
    kx, ky, kw, kb = jax.random.split(key, 4)
    x = jax.random.normal(kx, (N, C, H, W), dtype=jnp.float32)
    y = jax.random.normal(ky, (N, C * 9, H, W), dtype=jnp.float32)
    # Deterministic synthetic parameters for self.fuse = Conv2d(C, C, 3, 1, 1).
    fuse_w = 0.1 * jax.random.normal(kw, (C, C, 3, 3), dtype=jnp.float32)
    fuse_b = 0.1 * jax.random.normal(kb, (C,), dtype=jnp.float32)

    # DepthDC is used with kernel_size (= unfold dilation/padding) in {1, 3, 5} inside the net.
    # block_rows=8 exercises the row-tiled halo path; block_rows=None exercises the VMEM-budget
    # based default pick.
    for ks, br in ((1, 8), (3, 8), (5, 8), (3, None)):
        ref = depthdc_reference(x, y, fuse_w, fuse_b, ks)
        scale = float(jnp.max(jnp.abs(ref)))

        # f32 streaming path: validates indexing / halos / masks / fuse-conv structure.
        out32 = jax.block_until_ready(
            depthdc_forward(x, y, fuse_w, fuse_b, ks, block_rows=br,
                            compute_dtype=jnp.float32))
        assert out32.shape == (N, C, H, W)
        err32 = float(jnp.max(jnp.abs(out32 - ref)))
        assert err32 <= 1e-2 * scale + 1e-3, \
            f"f32 path mismatch (kernel_size={ks}, block_rows={br}): max err {err32}"

        # Default fast path: bf16 streaming, f32 accumulation.
        out16 = jax.block_until_ready(
            depthdc_forward(x, y, fuse_w, fuse_b, ks, block_rows=br))
        assert out16.shape == (N, C, H, W)
        err16 = float(jnp.max(jnp.abs(out16 - ref)))
        assert err16 <= 4e-2 * scale + 5e-3, \
            f"bf16 path mismatch (kernel_size={ks}, block_rows={br}): max err {err16}"

    print("KERNEL_OK")
</pallas_src>

<mosaic_0001>
module attributes {stable_mosaic.version = 11 : i64} {
  func.func @_filter_kernel(%arg0: i32, %arg1: i32, %arg2: memref<1x4x128xf32, #tpu.memory_space<vmem>>, %arg3: memref<1x4x128xf32, #tpu.memory_space<vmem>>, %arg4: memref<1x4x128xf32, #tpu.memory_space<vmem>>, %arg5: memref<1x4x128xf32, #tpu.memory_space<vmem>>, %arg6: memref<1x4x128xf32, #tpu.memory_space<vmem>>, %arg7: memref<1x4x128xf32, #tpu.memory_space<vmem>>, %arg8: memref<1x4x128xf32, #tpu.memory_space<vmem>>, %arg9: memref<1x4x128xf32, #tpu.memory_space<vmem>>, %arg10: memref<1x4x128xf32, #tpu.memory_space<vmem>>, %arg11: memref<1x4x128xf32, #tpu.memory_space<vmem>>, %arg12: memref<1x4x128xf32, #tpu.memory_space<vmem>>, %arg13: memref<1x4x128xf32, #tpu.memory_space<vmem>>, %arg14: memref<1x4x128xf32, #tpu.memory_space<vmem>>, %arg15: memref<4x384xf32, #tpu.memory_space<vmem>>) attributes {dimension_semantics = [#tpu.dimension_semantics<parallel>, #tpu.dimension_semantics<parallel>], iteration_bounds = array<i64: 2, 2>, scalar_prefetch = 0 : i64, scratch_operands = 1 : i64, tpu.core_type = #tpu.core_type<tc>, window_params = [{transform_indices = @transform_0, window_bounds = array<i64: 1, 4, 128>}, {transform_indices = @transform_1, window_bounds = array<i64: 1, 4, 128>}, {transform_indices = @transform_2, window_bounds = array<i64: 1, 4, 128>}, {transform_indices = @transform_3, window_bounds = array<i64: 1, 4, 128>}, {transform_indices = @transform_4, window_bounds = array<i64: 1, 4, 128>}, {transform_indices = @transform_5, window_bounds = array<i64: 1, 4, 128>}, {transform_indices = @transform_6, window_bounds = array<i64: 1, 4, 128>}, {transform_indices = @transform_7, window_bounds = array<i64: 1, 4, 128>}, {transform_indices = @transform_8, window_bounds = array<i64: 1, 4, 128>}, {transform_indices = @transform_9, window_bounds = array<i64: 1, 4, 128>}, {transform_indices = @transform_10, window_bounds = array<i64: 1, 4, 128>}, {transform_indices = @transform_11, window_bounds = array<i64: 1, 4, 128>}, {transform_indices = @transform_12, window_bounds = array<i64: 1, 4, 128>}]} {
    %c0 = arith.constant 0 : index
    %c0_0 = arith.constant 0 : index
    %c0_1 = arith.constant 0 : index
    %0 = vector.load %arg2[%c0, %c0_0, %c0_1] : memref<1x4x128xf32, #tpu.memory_space<vmem>>, vector<1x4x128xf32>
    %1 = vector.shape_cast %0 : vector<1x4x128xf32> to vector<4x128xf32>
    %c0_2 = arith.constant 0 : index
    %c0_3 = arith.constant 0 : index
    %2 = vector.load %arg15[%c0_2, %c0_3] : memref<4x384xf32, #tpu.memory_space<vmem>>, vector<4x128xf32>
    tpu.vector_store %arg15[%c0_2, %c0_3], %1 {strides = array<i32>} : memref<4x384xf32, #tpu.memory_space<vmem>>, vector<4x128xf32>,
    %c0_4 = arith.constant 0 : index
    %c0_5 = arith.constant 0 : index
    %c0_6 = arith.constant 0 : index
    %3 = vector.load %arg3[%c0_4, %c0_5, %c0_6] : memref<1x4x128xf32, #tpu.memory_space<vmem>>, vector<1x4x128xf32>
    %4 = vector.shape_cast %3 : vector<1x4x128xf32> to vector<4x128xf32>
    %c0_7 = arith.constant 0 : index
    %c128 = arith.constant 128 : index
    %5 = vector.load %arg15[%c0_7, %c128] : memref<4x384xf32, #tpu.memory_space<vmem>>, vector<4x128xf32>
    tpu.vector_store %arg15[%c0_7, %c128], %4 {strides = array<i32>} : memref<4x384xf32, #tpu.memory_space<vmem>>, vector<4x128xf32>,
    %c0_8 = arith.constant 0 : index
    %c0_9 = arith.constant 0 : index
    %c0_10 = arith.constant 0 : index
    %6 = vector.load %arg4[%c0_8, %c0_9, %c0_10] : memref<1x4x128xf32, #tpu.memory_space<vmem>>, vector<1x4x128xf32>
    %7 = vector.shape_cast %6 : vector<1x4x128xf32> to vector<4x128xf32>
    %c0_11 = arith.constant 0 : index
    %c256 = arith.constant 256 : index
    %8 = vector.load %arg15[%c0_11, %c256] : memref<4x384xf32, #tpu.memory_space<vmem>>, vector<4x128xf32>
    tpu.vector_store %arg15[%c0_11, %c256], %7 {strides = array<i32>} : memref<4x384xf32, #tpu.memory_space<vmem>>, vector<4x128xf32>,
    %c0_12 = arith.constant 0 : index
    %c0_13 = arith.constant 0 : index
    %9 = vector.load %arg15[%c0_12, %c0_13] : memref<4x384xf32, #tpu.memory_space<vmem>>, vector<4x384xf32>
    %10 = tpu.iota {dimensions = array<i32: 1>} : vector<1x384xi32>
    %c16_i32 = arith.constant 16 : i32
    %c0_i32 = arith.constant 0 : i32
    %11 = arith.cmpi eq, %c16_i32, %c0_i32 : i32
    %c1_i32 = arith.constant 1 : i32
    %12 = arith.select %11, %c1_i32, %c16_i32 : i32
    %13 = vector.broadcast %12 : i32 to vector<1x384xi32>
    %14 = arith.remsi %10, %13 : vector<1x384xi32>
    %c0_i32_14 = arith.constant 0 : i32
    %15 = vector.broadcast %c0_i32_14 : i32 to vector<1x384xi32>
    %16 = arith.cmpi ne, %14, %15 : vector<1x384xi32>
    %c0_i32_15 = arith.constant 0 : i32
    %17 = vector.broadcast %c0_i32_15 : i32 to vector<1x384xi32>
    %18 = arith.cmpi slt, %14, %17 : vector<1x384xi32>
    %c0_i32_16 = arith.constant 0 : i32
    %19 = arith.cmpi slt, %12, %c0_i32_16 : i32
    %20 = vector.broadcast %19 : i1 to vector<1x384xi1>
    %21 = vector.broadcast %20 : vector<1x384xi1> to vector<1x384xi1>
    %22 = arith.xori %18, %21 : vector<1x384xi1>
    %23 = arith.andi %22, %16 : vector<1x384xi1>
    %24 = vector.broadcast %12 : i32 to vector<1x384xi32>
    %25 = arith.addi %14, %24 : vector<1x384xi32>
    %26 = arith.select %23, %25, %14 : vector<1x384xi1>, vector<1x384xi32>
    %c1_i32_17 = arith.constant 1 : i32
    %27 = tpu.dynamic_rotate %9 by %c1_i32_17 dim 1 : vector<4x384xf32>, i32 -> vector<4x384xf32>
    %c1_i32_18 = arith.constant 1 : i32
    %28 = vector.broadcast %c1_i32_18 : i32 to vector<1x384xi32>
    %29 = arith.cmpi sge, %26, %28 : vector<1x384xi32>
    %cst = arith.constant 0.000000e+00 : f32
    %30 = vector.shape_cast %29 : vector<1x384xi1> to vector<1x384xi1>
    %31 = vector.broadcast %30 : vector<1x384xi1> to vector<4x384xi1>
    %32 = vector.broadcast %cst : f32 to vector<4x384xf32>
    %33 = arith.select %31, %27, %32 : vector<4x384xi1>, vector<4x384xf32>
    %c383_i32 = arith.constant 383 : i32
    %34 = tpu.dynamic_rotate %9 by %c383_i32 dim 1 : vector<4x384xf32>, i32 -> vector<4x384xf32>
    %c15_i32 = arith.constant 15 : i32
    %35 = vector.broadcast %c15_i32 : i32 to vector<1x384xi32>
    %36 = arith.cmpi slt, %26, %35 : vector<1x384xi32>
    %cst_19 = arith.constant 0.000000e+00 : f32
    %37 = vector.shape_cast %36 : vector<1x384xi1> to vector<1x384xi1>
    %38 = vector.broadcast %37 : vector<1x384xi1> to vector<4x384xi1>
    %39 = vector.broadcast %cst_19 : f32 to vector<4x384xf32>
    %40 = arith.select %38, %34, %39 : vector<4x384xi1>, vector<4x384xf32>
    %41 = tpu.iota {dimensions = array<i32: 1>} : vector<1x128xi32>
    %c0_i32_20 = arith.constant 0 : i32
    %42 = arith.cmpi sgt, %arg1, %c0_i32_20 : i32
    %c16_i32_21 = arith.constant 16 : i32
    %43 = vector.broadcast %c16_i32_21 : i32 to vector<1x128xi32>
    %44 = arith.cmpi sge, %41, %43 : vector<1x128xi32>
    %45 = vector.broadcast %42 : i1 to vector<1x128xi1>
    %46 = arith.ori %45, %44 : vector<1x128xi1>
    %c1_i32_22 = arith.constant 1 : i32
    %47 = arith.cmpi slt, %arg1, %c1_i32_22 : i32
    %c112_i32 = arith.constant 112 : i32
    %48 = vector.broadcast %c112_i32 : i32 to vector<1x128xi32>
    %49 = arith.cmpi slt, %41, %48 : vector<1x128xi32>
    %50 = vector.broadcast %47 : i1 to vector<1x128xi1>
    %51 = arith.ori %50, %49 : vector<1x128xi1>
    %cst_23 = arith.constant 0.000000e+00 : f32
    %52 = vector.broadcast %cst_23 : f32 to vector<4x128xf32>
    %cst_24 = arith.constant 0.000000e+00 : f32
    %53 = vector.broadcast %cst_24 : f32 to vector<4x128xf32>
    %54 = vector.extract_strided_slice %33 {offsets = [0, 112], sizes = [4, 128], strides = [1, 1]} : vector<4x384xf32> to vector<4x128xf32>
    %c0_25 = arith.constant 0 : index
    %c0_26 = arith.constant 0 : index
    %c0_27 = arith.constant 0 : index
    %55 = vector.load %arg5[%c0_25, %c0_26, %c0_27] : memref<1x4x128xf32, #tpu.memory_space<vmem>>, vector<1x4x128xf32>
    %56 = vector.shape_cast %55 : vector<1x4x128xf32> to vector<4x128xf32>
    %57 = arith.mulf %54, %56 : vector<4x128xf32>
    %58 = arith.addf %53, %57 : vector<4x128xf32>
    %59 = vector.extract_strided_slice %9 {offsets = [0, 112], sizes = [4, 128], strides = [1, 1]} : vector<4x384xf32> to vector<4x128xf32>
    %c0_28 = arith.constant 0 : index
    %c0_29 = arith.constant 0 : index
    %c0_30 = arith.constant 0 : index
    %60 = vector.load %arg6[%c0_28, %c0_29, %c0_30] : memref<1x4x128xf32, #tpu.memory_space<vmem>>, vector<1x4x128xf32>
    %61 = vector.shape_cast %60 : vector<1x4x128xf32> to vector<4x128xf32>
    %62 = arith.mulf %59, %61 : vector<4x128xf32>
    %63 = arith.addf %58, %62 : vector<4x128xf32>
    %64 = vector.extract_strided_slice %40 {offsets = [0, 112], sizes = [4, 128], strides = [1, 1]} : vector<4x384xf32> to vector<4x128xf32>
    %c0_31 = arith.constant 0 : index
    %c0_32 = arith.constant 0 : index
    %c0_33 = arith.constant 0 : index
    %65 = vector.load %arg7[%c0_31, %c0_32, %c0_33] : memref<1x4x128xf32, #tpu.memory_space<vmem>>, vector<1x4x128xf32>
    %66 = vector.shape_cast %65 : vector<1x4x128xf32> to vector<4x128xf32>
    %67 = arith.mulf %64, %66 : vector<4x128xf32>
    %68 = arith.addf %63, %67 : vector<4x128xf32>
    %cst_34 = arith.constant 0.000000e+00 : f32
    %69 = vector.shape_cast %46 : vector<1x128xi1> to vector<1x128xi1>
    %70 = vector.broadcast %69 : vector<1x128xi1> to vector<4x128xi1>
    %71 = vector.broadcast %cst_34 : f32 to vector<4x128xf32>
    %72 = arith.select %70, %68, %71 : vector<4x128xi1>, vector<4x128xf32>
    %73 = arith.addf %52, %72 : vector<4x128xf32>
    %cst_35 = arith.constant 0.000000e+00 : f32
    %74 = vector.broadcast %cst_35 : f32 to vector<4x128xf32>
    %75 = vector.extract_strided_slice %33 {offsets = [0, 128], sizes = [4, 128], strides = [1, 1]} : vector<4x384xf32> to vector<4x128xf32>
    %c0_36 = arith.constant 0 : index
    %c0_37 = arith.constant 0 : index
    %c0_38 = arith.constant 0 : index
    %76 = vector.load %arg8[%c0_36, %c0_37, %c0_38] : memref<1x4x128xf32, #tpu.memory_space<vmem>>, vector<1x4x128xf32>
    %77 = vector.shape_cast %76 : vector<1x4x128xf32> to vector<4x128xf32>
    %78 = arith.mulf %75, %77 : vector<4x128xf32>
    %79 = arith.addf %74, %78 : vector<4x128xf32>
    %80 = vector.extract_strided_slice %9 {offsets = [0, 128], sizes = [4, 128], strides = [1, 1]} : vector<4x384xf32> to vector<4x128xf32>
    %c0_39 = arith.constant 0 : index
    %c0_40 = arith.constant 0 : index
    %c0_41 = arith.constant 0 : index
    %81 = vector.load %arg9[%c0_39, %c0_40, %c0_41] : memref<1x4x128xf32, #tpu.memory_space<vmem>>, vector<1x4x128xf32>
    %82 = vector.shape_cast %81 : vector<1x4x128xf32> to vector<4x128xf32>
    %83 = arith.mulf %80, %82 : vector<4x128xf32>
    %84 = arith.addf %79, %83 : vector<4x128xf32>
    %85 = vector.extract_strided_slice %40 {offsets = [0, 128], sizes = [4, 128], strides = [1, 1]} : vector<4x384xf32> to vector<4x128xf32>
    %c0_42 = arith.constant 0 : index
    %c0_43 = arith.constant 0 : index
    %c0_44 = arith.constant 0 : index
    %86 = vector.load %arg10[%c0_42, %c0_43, %c0_44] : memref<1x4x128xf32, #tpu.memory_space<vmem>>, vector<1x4x128xf32>
    %87 = vector.shape_cast %86 : vector<1x4x128xf32> to vector<4x128xf32>
    %88 = arith.mulf %85, %87 : vector<4x128xf32>
    %89 = arith.addf %84, %88 : vector<4x128xf32>
    %90 = arith.addf %73, %89 : vector<4x128xf32>
    %cst_45 = arith.constant 0.000000e+00 : f32
    %91 = vector.broadcast %cst_45 : f32 to vector<4x128xf32>
    %92 = vector.extract_strided_slice %33 {offsets = [0, 144], sizes = [4, 128], strides = [1, 1]} : vector<4x384xf32> to vector<4x128xf32>
    %c0_46 = arith.constant 0 : index
    %c0_47 = arith.constant 0 : index
    %c0_48 = arith.constant 0 : index
    %93 = vector.load %arg11[%c0_46, %c0_47, %c0_48] : memref<1x4x128xf32, #tpu.memory_space<vmem>>, vector<1x4x128xf32>
    %94 = vector.shape_cast %93 : vector<1x4x128xf32> to vector<4x128xf32>
    %95 = arith.mulf %92, %94 : vector<4x128xf32>
    %96 = arith.addf %91, %95 : vector<4x128xf32>
    %97 = vector.extract_strided_slice %9 {offsets = [0, 144], sizes = [4, 128], strides = [1, 1]} : vector<4x384xf32> to vector<4x128xf32>
    %c0_49 = arith.constant 0 : index
    %c0_50 = arith.constant 0 : index
    %c0_51 = arith.constant 0 : index
    %98 = vector.load %arg12[%c0_49, %c0_50, %c0_51] : memref<1x4x128xf32, #tpu.memory_space<vmem>>, vector<1x4x128xf32>
    %99 = vector.shape_cast %98 : vector<1x4x128xf32> to vector<4x128xf32>
    %100 = arith.mulf %97, %99 : vector<4x128xf32>
    %101 = arith.addf %96, %100 : vector<4x128xf32>
    %102 = vector.extract_strided_slice %40 {offsets = [0, 144], sizes = [4, 128], strides = [1, 1]} : vector<4x384xf32> to vector<4x128xf32>
    %c0_52 = arith.constant 0 : index
    %c0_53 = arith.constant 0 : index
    %c0_54 = arith.constant 0 : index
    %103 = vector.load %arg13[%c0_52, %c0_53, %c0_54] : memref<1x4x128xf32, #tpu.memory_space<vmem>>, vector<1x4x128xf32>
    %104 = vector.shape_cast %103 : vector<1x4x128xf32> to vector<4x128xf32>
    %105 = arith.mulf %102, %104 : vector<4x128xf32>
    %106 = arith.addf %101, %105 : vector<4x128xf32>
    %cst_55 = arith.constant 0.000000e+00 : f32
    %107 = vector.shape_cast %51 : vector<1x128xi1> to vector<1x128xi1>
    %108 = vector.broadcast %107 : vector<1x128xi1> to vector<4x128xi1>
    %109 = vector.broadcast %cst_55 : f32 to vector<4x128xf32>
    %110 = arith.select %108, %106, %109 : vector<4x128xi1>, vector<4x128xf32>
    %111 = arith.addf %90, %110 : vector<4x128xf32>
    %c0_56 = arith.constant 0 : index
    %c0_57 = arith.constant 0 : index
    %c0_58 = arith.constant 0 : index
    %112 = vector.load %arg14[%c0_56, %c0_57, %c0_58] : memref<1x4x128xf32, #tpu.memory_space<vmem>>, vector<1x4x128xf32>
    %113 = vector.shape_cast %112 : vector<1x4x128xf32> to vector<4x128xf32>
    %114 = vector.shape_cast %111 : vector<4x128xf32> to vector<1x4x128xf32>
    tpu.vector_store %arg14[%c0_56, %c0_57, %c0_58], %114 {strides = array<i32>} : memref<1x4x128xf32, #tpu.memory_space<vmem>>, vector<1x4x128xf32>,
    return
  }
  func.func @transform_0(%arg0: i32, %arg1: i32) -> (i32, i32, i32) {
    %c1_i32 = arith.constant 1 : i32
    %0 = arith.muli %arg1, %c1_i32 : i32
    %c1_i32_0 = arith.constant 1 : i32
    %1 = arith.subi %0, %c1_i32_0 : i32
    %c0_i32 = arith.constant 0 : i32
    %2 = arith.maxsi %1, %c0_i32 : i32
    %c0_i32_1 = arith.constant 0 : i32
    %c0_i32_2 = arith.constant 0 : i32
    return %arg0, %c0_i32_1, %2 : i32, i32, i32
  }
  func.func @transform_1(%arg0: i32, %arg1: i32) -> (i32, i32, i32) {
    %c0_i32 = arith.constant 0 : i32
    %c0_i32_0 = arith.constant 0 : i32
    return %arg0, %c0_i32, %arg1 : i32, i32, i32
  }
  func.func @transform_2(%arg0: i32, %arg1: i32) -> (i32, i32, i32) {
    %c1_i32 = arith.constant 1 : i32
    %0 = arith.addi %arg1, %c1_i32 : i32
    %c1_i32_0 = arith.constant 1 : i32
    %1 = arith.muli %0, %c1_i32_0 : i32
    %c1_i32_1 = arith.constant 1 : i32
    %2 = arith.minsi %1, %c1_i32_1 : i32
    %c0_i32 = arith.constant 0 : i32
    %c0_i32_2 = arith.constant 0 : i32
    return %arg0, %c0_i32, %2 : i32, i32, i32
  }
  func.func @transform_3(%arg0: i32, %arg1: i32) -> (i32, i32, i32) {
    %c0_i32 = arith.constant 0 : i32
    %0 = arith.addi %c0_i32, %arg1 : i32
    %c0_i32_0 = arith.constant 0 : i32
    %c0_i32_1 = arith.constant 0 : i32
    return %arg0, %c0_i32_0, %0 : i32, i32, i32
  }
  func.func @transform_4(%arg0: i32, %arg1: i32) -> (i32, i32, i32) {
    %c2_i32 = arith.constant 2 : i32
    %0 = arith.addi %c2_i32, %arg1 : i32
    %c0_i32 = arith.constant 0 : i32
    %c0_i32_0 = arith.constant 0 : i32
    return %arg0, %c0_i32, %0 : i32, i32, i32
  }
  func.func @transform_5(%arg0: i32, %arg1: i32) -> (i32, i32, i32) {
    %c4_i32 = arith.constant 4 : i32
    %0 = arith.addi %c4_i32, %arg1 : i32
    %c0_i32 = arith.constant 0 : i32
    %c0_i32_0 = arith.constant 0 : i32
    return %arg0, %c0_i32, %0 : i32, i32, i32
  }
  func.func @transform_6(%arg0: i32, %arg1: i32) -> (i32, i32, i32) {
    %c6_i32 = arith.constant 6 : i32
    %0 = arith.addi %c6_i32, %arg1 : i32
    %c0_i32 = arith.constant 0 : i32
    %c0_i32_0 = arith.constant 0 : i32
    return %arg0, %c0_i32, %0 : i32, i32, i32
  }
  func.func @transform_7(%arg0: i32, %arg1: i32) -> (i32, i32, i32) {
    %c8_i32 = arith.constant 8 : i32
    %0 = arith.addi %c8_i32, %arg1 : i32
    %c0_i32 = arith.constant 0 : i32
    %c0_i32_0 = arith.constant 0 : i32
    return %arg0, %c0_i32, %0 : i32, i32, i32
  }
  func.func @transform_8(%arg0: i32, %arg1: i32) -> (i32, i32, i32) {
    %c10_i32 = arith.constant 10 : i32
    %0 = arith.addi %c10_i32, %arg1 : i32
    %c0_i32 = arith.constant 0 : i32
    %c0_i32_0 = arith.constant 0 : i32
    return %arg0, %c0_i32, %0 : i32, i32, i32
  }
  func.func @transform_9(%arg0: i32, %arg1: i32) -> (i32, i32, i32) {
    %c12_i32 = arith.constant 12 : i32
    %0 = arith.addi %c12_i32, %arg1 : i32
    %c0_i32 = arith.constant 0 : i32
    %c0_i32_0 = arith.constant 0 : i32
    return %arg0, %c0_i32, %0 : i32, i32, i32
  }
  func.func @transform_10(%arg0: i32, %arg1: i32) -> (i32, i32, i32) {
    %c14_i32 = arith.constant 14 : i32
    %0 = arith.addi %c14_i32, %arg1 : i32
    %c0_i32 = arith.constant 0 : i32
    %c0_i32_0 = arith.constant 0 : i32
    return %arg0, %c0_i32, %0 : i32, i32, i32
  }
  func.func @transform_11(%arg0: i32, %arg1: i32) -> (i32, i32, i32) {
    %c16_i32 = arith.constant 16 : i32
    %0 = arith.addi %c16_i32, %arg1 : i32
    %c0_i32 = arith.constant 0 : i32
    %c0_i32_0 = arith.constant 0 : i32
    return %arg0, %c0_i32, %0 : i32, i32, i32
  }
  func.func @transform_12(%arg0: i32, %arg1: i32) -> (i32, i32, i32) {
    %c0_i32 = arith.constant 0 : i32
    %c0_i32_0 = arith.constant 0 : i32
    return %arg0, %c0_i32, %arg1 : i32, i32, i32
  }
}

</mosaic_0001>

<llo_original>
// kernel: tpu_custom_call.1
$region0: #{tpu_custom_call.1}
  #allocation0 [shape = 'u32[]', space=smem, size = 0x4, offset = 0x4, fixed_abs, tag = 'smem constant byte address 0x4 - core index']
  #allocation1 [shape = 'u32[144,128]{1,0:T(1,128)}', space=vmem, size = 0x12000, scoped, tag = 'internal scratch']
  #allocation2 [shape = 'f32[4,384]{1,0:T(4,128)}', space=vmem, size = 0x1800, scoped, tag = 'scratch operand']
  %s0 = inlined_call_operand.hbm [shape: f32[2,4,256], index: 0, kind: input, shape index: {}]
  %s1 = inlined_call_operand.hbm [shape: f32[2,4,256], index: 1, kind: input, shape index: {}]
  %s2 = inlined_call_operand.hbm [shape: f32[2,4,256], index: 2, kind: input, shape index: {}]
  %s3 = inlined_call_operand.hbm [shape: f32[2,4,2304], index: 3, kind: input, shape index: {}]
  %s4 = inlined_call_operand.hbm [shape: f32[2,4,2304], index: 4, kind: input, shape index: {}]
  %s5 = inlined_call_operand.hbm [shape: f32[2,4,2304], index: 5, kind: input, shape index: {}]
  %s6 = inlined_call_operand.hbm [shape: f32[2,4,2304], index: 6, kind: input, shape index: {}]
  %s7 = inlined_call_operand.hbm [shape: f32[2,4,2304], index: 7, kind: input, shape index: {}]
  %s8 = inlined_call_operand.hbm [shape: f32[2,4,2304], index: 8, kind: input, shape index: {}]
  %s9 = inlined_call_operand.hbm [shape: f32[2,4,2304], index: 9, kind: input, shape index: {}]
  %s10 = inlined_call_operand.hbm [shape: f32[2,4,2304], index: 10, kind: input, shape index: {}]
  %s11 = inlined_call_operand.hbm [shape: f32[2,4,2304], index: 11, kind: input, shape index: {}]
  %s12 = inlined_call_operand.hbm [shape: f32[2,4,256], index: 12, kind: output, shape index: {}]
  %s13 = sld [smem:[#allocation0]]
  $region129: #{tpu_custom_call.1} parent=0
    _
  %s15 = ssub.s32 1, %s13
  %s16 = scalar_select 0, %s15, %s13
  $region1: #{tpu_custom_call.1} parent=0
    #allocation3 [shape = 'u8[4096]{0}', space=vmem, size = 0x1000, scoped, tag = 'input window, operand 0']
    #allocation4 [shape = 's32[2]{0}', space=sflag, size = 0x8, scoped, tag = 'scoped memory for tpu_custom_call.1']
    #allocation5 [shape = 's32[2]{0}', space=sflag, size = 0x8, scoped, tag = 'scoped memory for tpu_custom_call.1']
    #allocation6 [shape = 'u8[4096]{0}', space=vmem, size = 0x1000, scoped, tag = 'input window, operand 1']
    #allocation7 [shape = 's32[2]{0}', space=sflag, size = 0x8, scoped, tag = 'scoped memory for tpu_custom_call.1']
    #allocation8 [shape = 'u8[4096]{0}', space=vmem, size = 0x1000, scoped, tag = 'input window, operand 2']
    #allocation9 [shape = 'u8[4096]{0}', space=vmem, size = 0x1000, scoped, tag = 'input window, operand 3']
    #allocation10 [shape = 's32[2]{0}', space=sflag, size = 0x8, scoped, tag = 'scoped memory for tpu_custom_call.1']
    #allocation11 [shape = 'u8[4096]{0}', space=vmem, size = 0x1000, scoped, tag = 'input window, operand 4']
    #allocation12 [shape = 'u8[4096]{0}', space=vmem, size = 0x1000, scoped, tag = 'input window, operand 5']
    #allocation13 [shape = 's32[2]{0}', space=sflag, size = 0x8, scoped, tag = 'scoped memory for tpu_custom_call.1']
    #allocation14 [shape = 'u8[4096]{0}', space=vmem, size = 0x1000, scoped, tag = 'input window, operand 6']
    #allocation15 [shape = 'u8[4096]{0}', space=vmem, size = 0x1000, scoped, tag = 'input window, operand 7']
    #allocation16 [shape = 's32[2]{0}', space=sflag, size = 0x8, scoped, tag = 'scoped memory for tpu_custom_call.1']
    #allocation17 [shape = 'u8[4096]{0}', space=vmem, size = 0x1000, scoped, tag = 'input window, operand 8']
    #allocation18 [shape = 'u8[4096]{0}', space=vmem, size = 0x1000, scoped, tag = 'input window, operand 9']
    #allocation19 [shape = 's32[2]{0}', space=sflag, size = 0x8, scoped, tag = 'scoped memory for tpu_custom_call.1']
    #allocation20 [shape = 'u8[4096]{0}', space=vmem, size = 0x1000, scoped, tag = 'input window, operand 10']
    #allocation21 [shape = 'u8[4096]{0}', space=vmem, size = 0x1000, scoped, tag = 'input window, operand 11']
    #allocation22 [shape = 's32[2]{0}', space=sflag, size = 0x8, scoped, tag = 'scoped memory for tpu_custom_call.1']
    #allocation23 [shape = 'u8[4096]{0}', space=vmem, size = 0x1000, scoped, tag = 'output window, operand 0']
    %17 = vsyncpa [#allocation4], 0
    %s18 = scalar_lea.sflag [#allocation4], 1
    %19 = vsyncpa %s18, 0
    %20 = vsyncpa [#allocation7], 0
    %s21 = scalar_lea.sflag [#allocation7], 1
    %22 = vsyncpa %s21, 0
    %23 = vsyncpa [#allocation10], 0
    %s24 = scalar_lea.sflag [#allocation10], 1
    %25 = vsyncpa %s24, 0
    %26 = vsyncpa [#allocation13], 0
    %s27 = scalar_lea.sflag [#allocation13], 1
    %28 = vsyncpa %s27, 0
    %29 = vsyncpa [#allocation16], 0
    %s30 = scalar_lea.sflag [#allocation16], 1
    %31 = vsyncpa %s30, 0
    %32 = vsyncpa [#allocation19], 0
    %s33 = scalar_lea.sflag [#allocation19], 1
    %34 = vsyncpa %s33, 0
    %35 = vsyncpa [#allocation22], 0
    %s36 = scalar_lea.sflag [#allocation22], 1
    %37 = vsyncpa %s36, 0
    %38 = vsyncpa [#allocation5], 0
    %s39 = scalar_lea.sflag [#allocation5], 1
    %40 = vsyncpa %s39, 0
    loop: start=0, step=1, limit=6
    $region2: #{tpu_custom_call.1} parent=1 // loop_pre_header
      _
    $region3: #{tpu_custom_call.1} parent=1 // loop_header
      %s42 = sphi 0, %s46
      %p43 = scmp.ge.s32.totalorder %s42, 6
      %s49 = sphi 0, %s61
      %s50 = sphi 0, %s57
      %s51 = sphi 0, %s49
      %s52 = sphi 0, %s50
      %s53 = sphi 0, %s51
      %s54 = sphi 0, %s52
      %s72 = sphi 0, %s74
      %s75 = sphi 0, %s72
      %s76 = sphi 0, %s75
      %s92 = sphi 0, %s76
      %s100 = sphi 0, %s102
      %s103 = sphi 0, %s100
      %s104 = sphi 0, %s103
      %s120 = sphi 0, %s104
      %s134 = sphi 0, %s136
      %s137 = sphi 0, %s134
      %s138 = sphi 0, %s137
      %s154 = sphi 0, %s138
      %s162 = sphi 0, %s164
      %s165 = sphi 0, %s162
      %s166 = sphi 0, %s165
      %s182 = sphi 0, %s166
      %s192 = sphi 0, %s194
      %s195 = sphi 0, %s192
      %s196 = sphi 0, %s195
      %s212 = sphi 0, %s196
      %s222 = sphi 0, %s224
      %s225 = sphi 0, %s222
      %s226 = sphi 0, %s225
      %s242 = sphi 0, %s226
      %s252 = sphi 0, %s254
      %s255 = sphi 0, %s252
      %s256 = sphi 0, %s255
      %s272 = sphi 0, %s256
      %s282 = sphi 0, %s284
      %s285 = sphi 0, %s282
      %s286 = sphi 0, %s285
      %s302 = sphi 0, %s286
      %s312 = sphi 0, %s314
      %s315 = sphi 0, %s312
      %s316 = sphi 0, %s315
      %s332 = sphi 0, %s316
      %s342 = sphi 0, %s344
      %s345 = sphi 0, %s342
      %s346 = sphi 0, %s345
      %s362 = sphi 0, %s346
      %s372 = sphi 0, %s374
      %s375 = sphi 0, %s372
      %s376 = sphi 0, %s375
      %s392 = sphi 0, %s376
      %s402 = sphi 0, %s404
      %s405 = sphi 0, %s402
      %s406 = sphi 0, %s405
      %s422 = sphi 0, %s406
      %s430 = sphi 0, %s432
      %s433 = sphi 0, %s430
      %s434 = sphi 0, %s433
      %s450 = sphi 0, %s434
    $region4: #{tpu_custom_call.1} parent=1 // loop_header_branch
      %45 = sbr.rel (%p43) target = $region8
    $region5: #{tpu_custom_call.1} parent=1 // loop_body
      %s47 = ssub.s32 %s42, 1
      %s48 = ssub.s32 %s42, 2
      %s55 = sadd.s32 1, %s50
      %p56 = scmp.ge.s32.totalorder %s55, 2
      %s57 = scalar_select %p56, 0, %s55
      %s58 = sadd.s32 1, %s49
      %s59 = scalar_select %p56, %s58, %s49
      %p60 = scmp.ge.s32.totalorder %s59, 2
      %s61 = scalar_select %p60, 0, %s59
      %s62 = ssub.s32 %s50, 1
      %p63 = scmp.gt.s32.totalorder %s62, 0
      %s64 = scalar_select %p63, %s62, 0
      %s65 = ssub.s32 %s57, 1
      %p66 = scmp.gt.s32.totalorder %s65, 0
      %s67 = scalar_select %p66, %s65, 0
      %s68 = ssub.s32 %s49, %s61
      %s69 = ssub.s32 %s64, %s67
      %s70 = sor.u32 %s68, %s69
      %p71 = scmp.eq.s32.totalorder %s70, 0
      %s73 = sadd.s32 %s72, 1
      %s74 = scalar_select %p71, %s72, %s73
      %p77 = pneg %p71
      %p78 = scmp.eq.s32.totalorder %s42, 3
      %p79 = por %p77, %p78
      %p80 = scmp.ne.s32.totalorder %s72, %s75
      %p81 = scmp.eq.s32.totalorder %s42, 0
      %p82 = por %p80, %p81
      %p83 = scmp.ne.s32.totalorder %s72, %s75
      %p84 = scmp.eq.s32.totalorder %s47, 3
      %p85 = por %p83, %p84
      %p86 = scmp.ne.s32.totalorder %s75, %s76
      %p87 = scmp.eq.s32.totalorder %s47, 0
      %p88 = por %p86, %p87
      %p89 = scmp.ne.s32.totalorder %s75, %s76
      %p90 = scmp.eq.s32.totalorder %s48, 3
      %p91 = por %p89, %p90
      %p93 = scmp.ne.s32.totalorder %s76, %s92
      %p94 = scmp.eq.s32.totalorder %s48, 0
      %p95 = por %p93, %p94
      %s96 = ssub.s32 %s49, %s61
      %s97 = ssub.s32 %s50, %s57
      %s98 = sor.u32 %s96, %s97
      %p99 = scmp.eq.s32.totalorder %s98, 0
      %s101 = sadd.s32 %s100, 1
      %s102 = scalar_select %p99, %s100, %s101
      %p105 = pneg %p99
      %p106 = scmp.eq.s32.totalorder %s42, 3
      %p107 = por %p105, %p106
      %p108 = scmp.ne.s32.totalorder %s100, %s103
      %p109 = scmp.eq.s32.totalorder %s42, 0
      %p110 = por %p108, %p109
      %p111 = scmp.ne.s32.totalorder %s100, %s103
      %p112 = scmp.eq.s32.totalorder %s47, 3
      %p113 = por %p111, %p112
      %p114 = scmp.ne.s32.totalorder %s103, %s104
      %p115 = scmp.eq.s32.totalorder %s47, 0
      %p116 = por %p114, %p115
      %p117 = scmp.ne.s32.totalorder %s103, %s104
      %p118 = scmp.eq.s32.totalorder %s48, 3
      %p119 = por %p117, %p118
      %p121 = scmp.ne.s32.totalorder %s104, %s120
      %p122 = scmp.eq.s32.totalorder %s48, 0
      %p123 = por %p121, %p122
      %s124 = sadd.s32 %s50, 1
      %p125 = scmp.lt.s32.totalorder %s124, 1
      %s126 = scalar_select %p125, %s124, 1
      %s127 = sadd.s32 %s57, 1
      %p128 = scmp.lt.s32.totalorder %s127, 1
      %s129 = scalar_select %p128, %s127, 1
      %s130 = ssub.s32 %s49, %s61
      %s131 = ssub.s32 %s126, %s129
      %s132 = sor.u32 %s130, %s131
      %p133 = scmp.eq.s32.totalorder %s132, 0
      %s135 = sadd.s32 %s134, 1
      %s136 = scalar_select %p133, %s134, %s135
      %p139 = pneg %p133
      %p140 = scmp.eq.s32.totalorder %s42, 3
      %p141 = por %p139, %p140
      %p142 = scmp.ne.s32.totalorder %s134, %s137
      %p143 = scmp.eq.s32.totalorder %s42, 0
      %p144 = por %p142, %p143
      %p145 = scmp.ne.s32.totalorder %s134, %s137
      %p146 = scmp.eq.s32.totalorder %s47, 3
      %p147 = por %p145, %p146
      %p148 = scmp.ne.s32.totalorder %s137, %s138
      %p149 = scmp.eq.s32.totalorder %s47, 0
      %p150 = por %p148, %p149
      %p151 = scmp.ne.s32.totalorder %s137, %s138
      %p152 = scmp.eq.s32.totalorder %s48, 3
      %p153 = por %p151, %p152
      %p155 = scmp.ne.s32.totalorder %s138, %s154
      %p156 = scmp.eq.s32.totalorder %s48, 0
      %p157 = por %p155, %p156
      %s158 = ssub.s32 %s49, %s61
      %s159 = ssub.s32 %s50, %s57
      %s160 = sor.u32 %s158, %s159
      %p161 = scmp.eq.s32.totalorder %s160, 0
      %s163 = sadd.s32 %s162, 1
      %s164 = scalar_select %p161, %s162, %s163
      %p167 = pneg %p161
      %p168 = scmp.eq.s32.totalorder %s42, 3
      %p169 = por %p167, %p168
      %p170 = scmp.ne.s32.totalorder %s162, %s165
      %p171 = scmp.eq.s32.totalorder %s42, 0
      %p172 = por %p170, %p171
      %p173 = scmp.ne.s32.totalorder %s162, %s165
      %p174 = scmp.eq.s32.totalorder %s47, 3
      %p175 = por %p173, %p174
      %p176 = scmp.ne.s32.totalorder %s165, %s166
      %p177 = scmp.eq.s32.totalorder %s47, 0
      %p178 = por %p176, %p177
      %p179 = scmp.ne.s32.totalorder %s165, %s166
      %p180 = scmp.eq.s32.totalorder %s48, 3
      %p181 = por %p179, %p180
      %p183 = scmp.ne.s32.totalorder %s166, %s182
      %p184 = scmp.eq.s32.totalorder %s48, 0
      %p185 = por %p183, %p184
      %s186 = sadd.s32 %s50, 2
      %s187 = sadd.s32 %s57, 2
      %s188 = ssub.s32 %s49, %s61
      %s189 = ssub.s32 %s186, %s187
      %s190 = sor.u32 %s188, %s189
      %p191 = scmp.eq.s32.totalorder %s190, 0
      %s193 = sadd.s32 %s192, 1
      %s194 = scalar_select %p191, %s192, %s193
      %p197 = pneg %p191
      %p198 = scmp.eq.s32.totalorder %s42, 3
      %p199 = por %p197, %p198
      %p200 = scmp.ne.s32.totalorder %s192, %s195
      %p201 = scmp.eq.s32.totalorder %s42, 0
      %p202 = por %p200, %p201
      %p203 = scmp.ne.s32.totalorder %s192, %s195
      %p204 = scmp.eq.s32.totalorder %s47, 3
      %p205 = por %p203, %p204
      %p206 = scmp.ne.s32.totalorder %s195, %s196
      %p207 = scmp.eq.s32.totalorder %s47, 0
      %p208 = por %p206, %p207
      %p209 = scmp.ne.s32.totalorder %s195, %s196
      %p210 = scmp.eq.s32.totalorder %s48, 3
      %p211 = por %p209, %p210
      %p213 = scmp.ne.s32.totalorder %s196, %s212
      %p214 = scmp.eq.s32.totalorder %s48, 0
      %p215 = por %p213, %p214
      %s216 = sadd.s32 %s50, 4
      %s217 = sadd.s32 %s57, 4
      %s218 = ssub.s32 %s49, %s61
      %s219 = ssub.s32 %s216, %s217
      %s220 = sor.u32 %s218, %s219
      %p221 = scmp.eq.s32.totalorder %s220, 0
      %s223 = sadd.s32 %s222, 1
      %s224 = scalar_select %p221, %s222, %s223
      %p227 = pneg %p221
      %p228 = scmp.eq.s32.totalorder %s42, 3
      %p229 = por %p227, %p228
      %p230 = scmp.ne.s32.totalorder %s222, %s225
      %p231 = scmp.eq.s32.totalorder %s42, 0
      %p232 = por %p230, %p231
      %p233 = scmp.ne.s32.totalorder %s222, %s225
      %p234 = scmp.eq.s32.totalorder %s47, 3
      %p235 = por %p233, %p234
      %p236 = scmp.ne.s32.totalorder %s225, %s226
      %p237 = scmp.eq.s32.totalorder %s47, 0
      %p238 = por %p236, %p237
      %p239 = scmp.ne.s32.totalorder %s225, %s226
      %p240 = scmp.eq.s32.totalorder %s48, 3
      %p241 = por %p239, %p240
      %p243 = scmp.ne.s32.totalorder %s226, %s242
      %p244 = scmp.eq.s32.totalorder %s48, 0
      %p245 = por %p243, %p244
      %s246 = sadd.s32 %s50, 6
      %s247 = sadd.s32 %s57, 6
      %s248 = ssub.s32 %s49, %s61
      %s249 = ssub.s32 %s246, %s247
      %s250 = sor.u32 %s248, %s249
      %p251 = scmp.eq.s32.totalorder %s250, 0
      %s253 = sadd.s32 %s252, 1
      %s254 = scalar_select %p251, %s252, %s253
      %p257 = pneg %p251
      %p258 = scmp.eq.s32.totalorder %s42, 3
      %p259 = por %p257, %p258
      %p260 = scmp.ne.s32.totalorder %s252, %s255
      %p261 = scmp.eq.s32.totalorder %s42, 0
      %p262 = por %p260, %p261
      %p263 = scmp.ne.s32.totalorder %s252, %s255
      %p264 = scmp.eq.s32.totalorder %s47, 3
      %p265 = por %p263, %p264
      %p266 = scmp.ne.s32.totalorder %s255, %s256
      %p267 = scmp.eq.s32.totalorder %s47, 0
      %p268 = por %p266, %p267
      %p269 = scmp.ne.s32.totalorder %s255, %s256
      %p270 = scmp.eq.s32.totalorder %s48, 3
      %p271 = por %p269, %p270
      %p273 = scmp.ne.s32.totalorder %s256, %s272
      %p274 = scmp.eq.s32.totalorder %s48, 0
      %p275 = por %p273, %p274
      %s276 = sadd.s32 %s50, 8
      %s277 = sadd.s32 %s57, 8
      %s278 = ssub.s32 %s49, %s61
      %s279 = ssub.s32 %s276, %s277
      %s280 = sor.u32 %s278, %s279
      %p281 = scmp.eq.s32.totalorder %s280, 0
      %s283 = sadd.s32 %s282, 1
      %s284 = scalar_select %p281, %s282, %s283
      %p287 = pneg %p281
      %p288 = scmp.eq.s32.totalorder %s42, 3
      %p289 = por %p287, %p288
      %p290 = scmp.ne.s32.totalorder %s282, %s285
      %p291 = scmp.eq.s32.totalorder %s42, 0
      %p292 = por %p290, %p291
      %p293 = scmp.ne.s32.totalorder %s282, %s285
      %p294 = scmp.eq.s32.totalorder %s47, 3
      %p295 = por %p293, %p294
      %p296 = scmp.ne.s32.totalorder %s285, %s286
      %p297 = scmp.eq.s32.totalorder %s47, 0
      %p298 = por %p296, %p297
      %p299 = scmp.ne.s32.totalorder %s285, %s286
      %p300 = scmp.eq.s32.totalorder %s48, 3
      %p301 = por %p299, %p300
      %p303 = scmp.ne.s32.totalorder %s286, %s302
      %p304 = scmp.eq.s32.totalorder %s48, 0
      %p305 = por %p303, %p304
      %s306 = sadd.s32 %s50, 10
      %s307 = sadd.s32 %s57, 10
      %s308 = ssub.s32 %s49, %s61
      %s309 = ssub.s32 %s306, %s307
      %s310 = sor.u32 %s308, %s309
      %p311 = scmp.eq.s32.totalorder %s310, 0
      %s313 = sadd.s32 %s312, 1
      %s314 = scalar_select %p311, %s312, %s313
      %p317 = pneg %p311
      %p318 = scmp.eq.s32.totalorder %s42, 3
      %p319 = por %p317, %p318
      %p320 = scmp.ne.s32.totalorder %s312, %s315
      %p321 = scmp.eq.s32.totalorder %s42, 0
      %p322 = por %p320, %p321
      %p323 = scmp.ne.s32.totalorder %s312, %s315
      %p324 = scmp.eq.s32.totalorder %s47, 3
      %p325 = por %p323, %p324
      %p326 = scmp.ne.s32.totalorder %s315, %s316
      %p327 = scmp.eq.s32.totalorder %s47, 0
      %p328 = por %p326, %p327
      %p329 = scmp.ne.s32.totalorder %s315, %s316
      %p330 = scmp.eq.s32.totalorder %s48, 3
      %p331 = por %p329, %p330
      %p333 = scmp.ne.s32.totalorder %s316, %s332
      %p334 = scmp.eq.s32.totalorder %s48, 0
      %p335 = por %p333, %p334
      %s336 = sadd.s32 %s50, 12
      %s337 = sadd.s32 %s57, 12
      %s338 = ssub.s32 %s49, %s61
      %s339 = ssub.s32 %s336, %s337
      %s340 = sor.u32 %s338, %s339
      %p341 = scmp.eq.s32.totalorder %s340, 0
      %s343 = sadd.s32 %s342, 1
      %s344 = scalar_select %p341, %s342, %s343
      %p347 = pneg %p341
      %p348 = scmp.eq.s32.totalorder %s42, 3
      %p349 = por %p347, %p348
      %p350 = scmp.ne.s32.totalorder %s342, %s345
      %p351 = scmp.eq.s32.totalorder %s42, 0
      %p352 = por %p350, %p351
      %p353 = scmp.ne.s32.totalorder %s342, %s345
      %p354 = scmp.eq.s32.totalorder %s47, 3
      %p355 = por %p353, %p354
      %p356 = scmp.ne.s32.totalorder %s345, %s346
      %p357 = scmp.eq.s32.totalorder %s47, 0
      %p358 = por %p356, %p357
      %p359 = scmp.ne.s32.totalorder %s345, %s346
      %p360 = scmp.eq.s32.totalorder %s48, 3
      %p361 = por %p359, %p360
      %p363 = scmp.ne.s32.totalorder %s346, %s362
      %p364 = scmp.eq.s32.totalorder %s48, 0
      %p365 = por %p363, %p364
      %s366 = sadd.s32 %s50, 14
      %s367 = sadd.s32 %s57, 14
      %s368 = ssub.s32 %s49, %s61
      %s369 = ssub.s32 %s366, %s367
      %s370 = sor.u32 %s368, %s369
      %p371 = scmp.eq.s32.totalorder %s370, 0
      %s373 = sadd.s32 %s372, 1
      %s374 = scalar_select %p371, %s372, %s373
      %p377 = pneg %p371
      %p378 = scmp.eq.s32.totalorder %s42, 3
      %p379 = por %p377, %p378
      %p380 = scmp.ne.s32.totalorder %s372, %s375
      %p381 = scmp.eq.s32.totalorder %s42, 0
      %p382 = por %p380, %p381
      %p383 = scmp.ne.s32.totalorder %s372, %s375
      %p384 = scmp.eq.s32.totalorder %s47, 3
      %p385 = por %p383, %p384
      %p386 = scmp.ne.s32.totalorder %s375, %s376
      %p387 = scmp.eq.s32.totalorder %s47, 0
      %p388 = por %p386, %p387
      %p389 = scmp.ne.s32.totalorder %s375, %s376
      %p390 = scmp.eq.s32.totalorder %s48, 3
      %p391 = por %p389, %p390
      %p393 = scmp.ne.s32.totalorder %s376, %s392
      %p394 = scmp.eq.s32.totalorder %s48, 0
      %p395 = por %p393, %p394
      %s396 = sadd.s32 %s50, 16
      %s397 = sadd.s32 %s57, 16
      %s398 = ssub.s32 %s49, %s61
      %s399 = ssub.s32 %s396, %s397
      %s400 = sor.u32 %s398, %s399
      %p401 = scmp.eq.s32.totalorder %s400, 0
      %s403 = sadd.s32 %s402, 1
      %s404 = scalar_select %p401, %s402, %s403
      %p407 = pneg %p401
      %p408 = scmp.eq.s32.totalorder %s42, 3
      %p409 = por %p407, %p408
      %p410 = scmp.ne.s32.totalorder %s402, %s405
      %p411 = scmp.eq.s32.totalorder %s42, 0
      %p412 = por %p410, %p411
      %p413 = scmp.ne.s32.totalorder %s402, %s405
      %p414 = scmp.eq.s32.totalorder %s47, 3
      %p415 = por %p413, %p414
      %p416 = scmp.ne.s32.totalorder %s405, %s406
      %p417 = scmp.eq.s32.totalorder %s47, 0
      %p418 = por %p416, %p417
      %p419 = scmp.ne.s32.totalorder %s405, %s406
      %p420 = scmp.eq.s32.totalorder %s48, 3
      %p421 = por %p419, %p420
      %p423 = scmp.ne.s32.totalorder %s406, %s422
      %p424 = scmp.eq.s32.totalorder %s48, 0
      %p425 = por %p423, %p424
      %s426 = ssub.s32 %s49, %s61
      %s427 = ssub.s32 %s50, %s57
      %s428 = sor.u32 %s426, %s427
      %p429 = scmp.eq.s32.totalorder %s428, 0
      %s431 = sadd.s32 %s430, 1
      %s432 = scalar_select %p429, %s430, %s431
      %p435 = pneg %p429
      %p436 = scmp.eq.s32.totalorder %s42, 3
      %p437 = por %p435, %p436
      %p438 = scmp.ne.s32.totalorder %s430, %s433
      %p439 = scmp.eq.s32.totalorder %s42, 0
      %p440 = por %p438, %p439
      %p441 = scmp.ne.s32.totalorder %s430, %s433
      %p442 = scmp.eq.s32.totalorder %s47, 3
      %p443 = por %p441, %p442
      %p444 = scmp.ne.s32.totalorder %s433, %s434
      %p445 = scmp.eq.s32.totalorder %s47, 0
      %p446 = por %p444, %p445
      %p447 = scmp.ne.s32.totalorder %s433, %s434
      %p448 = scmp.eq.s32.totalorder %s48, 3
      %p449 = por %p447, %p448
      %p451 = scmp.ne.s32.totalorder %s434, %s450
      %p452 = scmp.eq.s32.totalorder %s48, 0
      %p453 = por %p451, %p452
      %p454 = scmp.le.s32.totalorder 1, %s42
      %p455 = scmp.lt.s32.totalorder %s42, 5
      %p456 = pnand %p454, %p455
      %p457 = pneg %p456
      // Predicated region
      $region9: #{tpu_custom_call.1} parent=5 // pred_check
        _
      $region10: #{tpu_custom_call.1} parent=5 // pred_check_branch
        %459 = sbr.rel (%p456) target = $region12
      $region11: #{tpu_custom_call.1} parent=5 // pred_region
        %s460 = ssub.s32 %s42, 1
      $region12: #{tpu_custom_call.1} parent=5 // pred_fallthru
        _
      %p461 = scmp.lt.s32.totalorder %s42, 4
      // Predicated region
      $region13: #{tpu_custom_call.1} parent=5 // pred_check
        %p462 = pneg %p461
      $region14: #{tpu_custom_call.1} parent=5 // pred_check_branch
        %464 = sbr.rel (%p462) target = $region16
      $region15: #{tpu_custom_call.1} parent=5 // pred_region
        // Predicated region
        $region17: #{tpu_custom_call.1} parent=15 // pred_check
          %p465 = pneg %p82
        $region18: #{tpu_custom_call.1} parent=15 // pred_check_branch
          %467 = sbr.rel (%p465) target = $region20
        $region19: #{tpu_custom_call.1} parent=15 // pred_region
          %s468 = sand.u32 %s72, 1
          %s469 = scalar_lea.sflag [#allocation4], %s468
          %s470 = sand.u32 %s72, 1
          %s471 = smul.addr %s470, 4
          %s472 = scalar_lea.vmem [#allocation3], %s471
          %s473 = ssub.s32 %s50, 1
          %p474 = scmp.gt.s32.totalorder %s473, 0
          %s475 = scalar_select %p474, %s473, 0
          %s477 = ssub.s32 64, 64
          %478 = vsyncadd %s469, %s477
          %s479 = smul.addr %s49, 2
          %s480 = sadd.s32 %s475, %s479
          %s481 = smul.addr %s480, 64
          %s482 = scalar_lea.hbm %s0, %s481
          %s484 = sshll.u32 %s472, 4
          %s485 = int_to_ptr.vmem [resolvable:$true] %s484
          %487 = dma.hbm_to_vmem [thread:$0]  %s482, 64, %s485, %s469
        $region20: #{tpu_custom_call.1} parent=15 // pred_fallthru
          _
        // Predicated region
        $region21: #{tpu_custom_call.1} parent=15 // pred_check
          %p488 = pneg %p110
        $region22: #{tpu_custom_call.1} parent=15 // pred_check_branch
          %490 = sbr.rel (%p488) target = $region24
        $region23: #{tpu_custom_call.1} parent=15 // pred_region
          %s491 = sand.u32 %s42, 1
          %s492 = scalar_lea.sflag [#allocation7], %s491
          %s493 = sand.u32 %s100, 1
          %s494 = smul.addr %s493, 4
          %s495 = scalar_lea.vmem [#allocation6], %s494
          %s497 = ssub.s32 64, 64
          %498 = vsyncadd %s492, %s497
          %s499 = smul.addr %s49, 2
          %s500 = sadd.s32 %s50, %s499
          %s501 = smul.addr %s500, 64
          %s502 = scalar_lea.hbm %s1, %s501
          %s504 = sshll.u32 %s495, 4
          %s505 = int_to_ptr.vmem [resolvable:$true] %s504
          %507 = dma.hbm_to_vmem [thread:$0]  %s502, 64, %s505, %s492
        $region24: #{tpu_custom_call.1} parent=15 // pred_fallthru
          _
        // Predicated region
        $region25: #{tpu_custom_call.1} parent=15 // pred_check
          %p508 = pneg %p144
        $region26: #{tpu_custom_call.1} parent=15 // pred_check_branch
          %510 = sbr.rel (%p508) target = $region28
        $region27: #{tpu_custom_call.1} parent=15 // pred_region
          %s511 = sand.u32 %s42, 1
          %s512 = scalar_lea.sflag [#allocation7], %s511
          %s513 = sand.u32 %s134, 1
          %s514 = smul.addr %s513, 4
          %s515 = scalar_lea.vmem [#allocation8], %s514
          %s516 = sadd.s32 %s50, 1
          %p517 = scmp.lt.s32.totalorder %s516, 1
          %s518 = scalar_select %p517, %s516, 1
          %s520 = ssub.s32 64, 64
          %521 = vsyncadd %s512, %s520
          %s522 = smul.addr %s49, 2
          %s523 = sadd.s32 %s518, %s522
          %s524 = smul.addr %s523, 64
          %s525 = scalar_lea.hbm %s2, %s524
          %s527 = sshll.u32 %s515, 4
          %s528 = int_to_ptr.vmem [resolvable:$true] %s527
          %530 = dma.hbm_to_vmem [thread:$0]  %s525, 64, %s528, %s512
        $region28: #{tpu_custom_call.1} parent=15 // pred_fallthru
          _
        // Predicated region
        $region29: #{tpu_custom_call.1} parent=15 // pred_check
          %p531 = pneg %p172
        $region30: #{tpu_custom_call.1} parent=15 // pred_check_branch
          %533 = sbr.rel (%p531) target = $region32
        $region31: #{tpu_custom_call.1} parent=15 // pred_region
          %s534 = sand.u32 %s42, 1
          %s535 = scalar_lea.sflag [#allocation10], %s534
          %s536 = sand.u32 %s162, 1
          %s537 = smul.addr %s536, 4
          %s538 = scalar_lea.vmem [#allocation9], %s537
          %s540 = ssub.s32 64, 64
          %541 = vsyncadd %s535, %s540
          %s542 = smul.addr %s49, 18
          %s543 = sadd.s32 %s50, %s542
          %s544 = smul.addr %s543, 64
          %s545 = scalar_lea.hbm %s3, %s544
          %s547 = sshll.u32 %s538, 4
          %s548 = int_to_ptr.vmem [resolvable:$true] %s547
          %550 = dma.hbm_to_vmem [thread:$0]  %s545, 64, %s548, %s535
        $region32: #{tpu_custom_call.1} parent=15 // pred_fallthru
          _
        // Predicated region
        $region33: #{tpu_custom_call.1} parent=15 // pred_check
          %p551 = pneg %p202
        $region34: #{tpu_custom_call.1} parent=15 // pred_check_branch
          %553 = sbr.rel (%p551) target = $region36
        $region35: #{tpu_custom_call.1} parent=15 // pred_region
          %s554 = sand.u32 %s42, 1
          %s555 = scalar_lea.sflag [#allocation10], %s554
          %s556 = sand.u32 %s192, 1
          %s557 = smul.addr %s556, 4
          %s558 = scalar_lea.vmem [#allocation11], %s557
          %s559 = sadd.s32 %s50, 2
          %s561 = ssub.s32 64, 64
          %562 = vsyncadd %s555, %s561
          %s563 = smul.addr %s49, 18
          %s564 = sadd.s32 %s559, %s563
          %s565 = smul.addr %s564, 64
          %s566 = scalar_lea.hbm %s4, %s565
          %s568 = sshll.u32 %s558, 4
          %s569 = int_to_ptr.vmem [resolvable:$true] %s568
          %571 = dma.hbm_to_vmem [thread:$0]  %s566, 64, %s569, %s555
        $region36: #{tpu_custom_call.1} parent=15 // pred_fallthru
          _
        // Predicated region
        $region37: #{tpu_custom_call.1} parent=15 // pred_check
          %p572 = pneg %p232
        $region38: #{tpu_custom_call.1} parent=15 // pred_check_branch
          %574 = sbr.rel (%p572) target = $region40
        $region39: #{tpu_custom_call.1} parent=15 // pred_region
          %s575 = sand.u32 %s42, 1
          %s576 = scalar_lea.sflag [#allocation13], %s575
          %s577 = sand.u32 %s222, 1
          %s578 = smul.addr %s577, 4
          %s579 = scalar_lea.vmem [#allocation12], %s578
          %s580 = sadd.s32 %s50, 4
          %s582 = ssub.s32 64, 64
          %583 = vsyncadd %s576, %s582
          %s584 = smul.addr %s49, 18
          %s585 = sadd.s32 %s580, %s584
          %s586 = smul.addr %s585, 64
          %s587 = scalar_lea.hbm %s5, %s586
          %s589 = sshll.u32 %s579, 4
          %s590 = int_to_ptr.vmem [resolvable:$true] %s589
          %592 = dma.hbm_to_vmem [thread:$0]  %s587, 64, %s590, %s576
        $region40: #{tpu_custom_call.1} parent=15 // pred_fallthru
          _
        // Predicated region
        $region41: #{tpu_custom_call.1} parent=15 // pred_check
          %p593 = pneg %p262
        $region42: #{tpu_custom_call.1} parent=15 // pred_check_branch
          %595 = sbr.rel (%p593) target = $region44
        $region43: #{tpu_custom_call.1} parent=15 // pred_region
          %s596 = sand.u32 %s42, 1
          %s597 = scalar_lea.sflag [#allocation13], %s596
          %s598 = sand.u32 %s252, 1
          %s599 = smul.addr %s598, 4
          %s600 = scalar_lea.vmem [#allocation14], %s599
          %s601 = sadd.s32 %s50, 6
          %s603 = ssub.s32 64, 64
          %604 = vsyncadd %s597, %s603
          %s605 = smul.addr %s49, 18
          %s606 = sadd.s32 %s601, %s605
          %s607 = smul.addr %s606, 64
          %s608 = scalar_lea.hbm %s6, %s607
          %s610 = sshll.u32 %s600, 4
          %s611 = int_to_ptr.vmem [resolvable:$true] %s610
          %613 = dma.hbm_to_vmem [thread:$0]  %s608, 64, %s611, %s597
        $region44: #{tpu_custom_call.1} parent=15 // pred_fallthru
          _
        // Predicated region
        $region45: #{tpu_custom_call.1} parent=15 // pred_check
          %p614 = pneg %p292
        $region46: #{tpu_custom_call.1} parent=15 // pred_check_branch
          %616 = sbr.rel (%p614) target = $region48
        $region47: #{tpu_custom_call.1} parent=15 // pred_region
          %s617 = sand.u32 %s42, 1
          %s618 = scalar_lea.sflag [#allocation16], %s617
          %s619 = sand.u32 %s282, 1
          %s620 = smul.addr %s619, 4
          %s621 = scalar_lea.vmem [#allocation15], %s620
          %s622 = sadd.s32 %s50, 8
          %s624 = ssub.s32 64, 64
          %625 = vsyncadd %s618, %s624
          %s626 = smul.addr %s49, 18
          %s627 = sadd.s32 %s622, %s626
          %s628 = smul.addr %s627, 64
          %s629 = scalar_lea.hbm %s7, %s628
          %s631 = sshll.u32 %s621, 4
          %s632 = int_to_ptr.vmem [resolvable:$true] %s631
          %634 = dma.hbm_to_vmem [thread:$0]  %s629, 64, %s632, %s618
        $region48: #{tpu_custom_call.1} parent=15 // pred_fallthru
          _
        // Predicated region
        $region49: #{tpu_custom_call.1} parent=15 // pred_check
          %p635 = pneg %p322
        $region50: #{tpu_custom_call.1} parent=15 // pred_check_branch
          %637 = sbr.rel (%p635) target = $region52
        $region51: #{tpu_custom_call.1} parent=15 // pred_region
          %s638 = sand.u32 %s42, 1
          %s639 = scalar_lea.sflag [#allocation16], %s638
          %s640 = sand.u32 %s312, 1
          %s641 = smul.addr %s640, 4
          %s642 = scalar_lea.vmem [#allocation17], %s641
          %s643 = sadd.s32 %s50, 10
          %s645 = ssub.s32 64, 64
          %646 = vsyncadd %s639, %s645
          %s647 = smul.addr %s49, 18
          %s648 = sadd.s32 %s643, %s647
          %s649 = smul.addr %s648, 64
          %s650 = scalar_lea.hbm %s8, %s649
          %s652 = sshll.u32 %s642, 4
          %s653 = int_to_ptr.vmem [resolvable:$true] %s652
          %655 = dma.hbm_to_vmem [thread:$0]  %s650, 64, %s653, %s639
        $region52: #{tpu_custom_call.1} parent=15 // pred_fallthru
          _
        // Predicated region
        $region53: #{tpu_custom_call.1} parent=15 // pred_check
          %p656 = pneg %p352
        $region54: #{tpu_custom_call.1} parent=15 // pred_check_branch
          %658 = sbr.rel (%p656) target = $region56
        $region55: #{tpu_custom_call.1} parent=15 // pred_region
          %s659 = sand.u32 %s42, 1
          %s660 = scalar_lea.sflag [#allocation19], %s659
          %s661 = sand.u32 %s342, 1
          %s662 = smul.addr %s661, 4
          %s663 = scalar_lea.vmem [#allocation18], %s662
          %s664 = sadd.s32 %s50, 12
          %s666 = ssub.s32 64, 64
          %667 = vsyncadd %s660, %s666
          %s668 = smul.addr %s49, 18
          %s669 = sadd.s32 %s664, %s668
          %s670 = smul.addr %s669, 64
          %s671 = scalar_lea.hbm %s9, %s670
          %s673 = sshll.u32 %s663, 4
          %s674 = int_to_ptr.vmem [resolvable:$true] %s673
          %676 = dma.hbm_to_vmem [thread:$0]  %s671, 64, %s674, %s660
        $region56: #{tpu_custom_call.1} parent=15 // pred_fallthru
          _
        // Predicated region
        $region57: #{tpu_custom_call.1} parent=15 // pred_check
          %p677 = pneg %p382
        $region58: #{tpu_custom_call.1} parent=15 // pred_check_branch
          %679 = sbr.rel (%p677) target = $region60
        $region59: #{tpu_custom_call.1} parent=15 // pred_region
          %s680 = sand.u32 %s42, 1
          %s681 = scalar_lea.sflag [#allocation19], %s680
          %s682 = sand.u32 %s372, 1
          %s683 = smul.addr %s682, 4
          %s684 = scalar_lea.vmem [#allocation20], %s683
          %s685 = sadd.s32 %s50, 14
          %s687 = ssub.s32 64, 64
          %688 = vsyncadd %s681, %s687
          %s689 = smul.addr %s49, 18
          %s690 = sadd.s32 %s685, %s689
          %s691 = smul.addr %s690, 64
          %s692 = scalar_lea.hbm %s10, %s691
          %s694 = sshll.u32 %s684, 4
          %s695 = int_to_ptr.vmem [resolvable:$true] %s694
          %697 = dma.hbm_to_vmem [thread:$0]  %s692, 64, %s695, %s681
        $region60: #{tpu_custom_call.1} parent=15 // pred_fallthru
          _
        // Predicated region
        $region61: #{tpu_custom_call.1} parent=15 // pred_check
          %p698 = pneg %p412
        $region62: #{tpu_custom_call.1} parent=15 // pred_check_branch
          %700 = sbr.rel (%p698) target = $region64
        $region63: #{tpu_custom_call.1} parent=15 // pred_region
          %s701 = sand.u32 %s402, 1
          %s702 = scalar_lea.sflag [#allocation22], %s701
          %s703 = sand.u32 %s402, 1
          %s704 = smul.addr %s703, 4
          %s705 = scalar_lea.vmem [#allocation21], %s704
          %s706 = sadd.s32 %s50, 16
          %s708 = ssub.s32 64, 64
          %709 = vsyncadd %s702, %s708
          %s710 = smul.addr %s49, 18
          %s711 = sadd.s32 %s706, %s710
          %s712 = smul.addr %s711, 64
          %s713 = scalar_lea.hbm %s11, %s712
          %s715 = sshll.u32 %s705, 4
          %s716 = int_to_ptr.vmem [resolvable:$true] %s715
          %718 = dma.hbm_to_vmem [thread:$0]  %s713, 64, %s716, %s702
        $region64: #{tpu_custom_call.1} parent=15 // pred_fallthru
          _
      $region16: #{tpu_custom_call.1} parent=5 // pred_fallthru
        _
      %p719 = scmp.le.s32.totalorder 1, %s42
      %p720 = scmp.lt.s32.totalorder %s42, 5
      %p721 = pnand %p719, %p720
      %p722 = pneg %p721
      // Predicated region
      $region65: #{tpu_custom_call.1} parent=5 // pred_check
        _
      $region66: #{tpu_custom_call.1} parent=5 // pred_check_branch
        %724 = sbr.rel (%p721) target = $region68
      $region67: #{tpu_custom_call.1} parent=5 // pred_region
        %s725 = ssub.s32 %s42, 1
        %s726 = sand.u32 %s75, 1
        %s727 = scalar_lea.sflag [#allocation4], %s726
        %s728 = sand.u32 %s75, 1
        %s729 = smul.addr %s728, 4
        %s730 = scalar_lea.vmem [#allocation3], %s729
        // Predicated region
        $region69: #{tpu_custom_call.1} parent=67 // pred_check
          %p731 = pneg %p88
        $region70: #{tpu_custom_call.1} parent=67 // pred_check_branch
          %733 = sbr.rel (%p731) target = $region72
        $region71: #{tpu_custom_call.1} parent=67 // pred_region
          %734 = dma.done %s727, 64
        $region72: #{tpu_custom_call.1} parent=67 // pred_fallthru
          _
        %s735 = sand.u32 %s47, 1
        %s736 = scalar_lea.sflag [#allocation7], %s735
        %s737 = sand.u32 %s103, 1
        %s738 = smul.addr %s737, 4
        %s739 = scalar_lea.vmem [#allocation6], %s738
        // Predicated region
        $region73: #{tpu_custom_call.1} parent=67 // pred_check
          %p740 = pneg %p116
        $region74: #{tpu_custom_call.1} parent=67 // pred_check_branch
          %742 = sbr.rel (%p740) target = $region76
        $region75: #{tpu_custom_call.1} parent=67 // pred_region
          %743 = dma.done %s736, 64
        $region76: #{tpu_custom_call.1} parent=67 // pred_fallthru
          _
        %s744 = sand.u32 %s47, 1
        %s745 = scalar_lea.sflag [#allocation7], %s744
        %s746 = sand.u32 %s137, 1
        %s747 = smul.addr %s746, 4
        %s748 = scalar_lea.vmem [#allocation8], %s747
        // Predicated region
        $region77: #{tpu_custom_call.1} parent=67 // pred_check
          %p749 = pneg %p150
        $region78: #{tpu_custom_call.1} parent=67 // pred_check_branch
          %751 = sbr.rel (%p749) target = $region80
        $region79: #{tpu_custom_call.1} parent=67 // pred_region
          %752 = dma.done %s745, 64
        $region80: #{tpu_custom_call.1} parent=67 // pred_fallthru
          _
        %s753 = sand.u32 %s47, 1
        %s754 = scalar_lea.sflag [#allocation10], %s753
        %s755 = sand.u32 %s165, 1
        %s756 = smul.addr %s755, 4
        %s757 = scalar_lea.vmem [#allocation9], %s756
        // Predicated region
        $region81: #{tpu_custom_call.1} parent=67 // pred_check
          %p758 = pneg %p178
        $region82: #{tpu_custom_call.1} parent=67 // pred_check_branch
          %760 = sbr.rel (%p758) target = $region84
        $region83: #{tpu_custom_call.1} parent=67 // pred_region
          %761 = dma.done %s754, 64
        $region84: #{tpu_custom_call.1} parent=67 // pred_fallthru
          _
        %s762 = sand.u32 %s47, 1
        %s763 = scalar_lea.sflag [#allocation10], %s762
        %s764 = sand.u32 %s195, 1
        %s765 = smul.addr %s764, 4
        %s766 = scalar_lea.vmem [#allocation11], %s765
        // Predicated region
        $region85: #{tpu_custom_call.1} parent=67 // pred_check
          %p767 = pneg %p208
        $region86: #{tpu_custom_call.1} parent=67 // pred_check_branch
          %769 = sbr.rel (%p767) target = $region88
        $region87: #{tpu_custom_call.1} parent=67 // pred_region
          %770 = dma.done %s763, 64
        $region88: #{tpu_custom_call.1} parent=67 // pred_fallthru
          _
        %s771 = sand.u32 %s47, 1
        %s772 = scalar_lea.sflag [#allocation13], %s771
        %s773 = sand.u32 %s225, 1
        %s774 = smul.addr %s773, 4
        %s775 = scalar_lea.vmem [#allocation12], %s774
        // Predicated region
        $region89: #{tpu_custom_call.1} parent=67 // pred_check
          %p776 = pneg %p238
        $region90: #{tpu_custom_call.1} parent=67 // pred_check_branch
          %778 = sbr.rel (%p776) target = $region92
        $region91: #{tpu_custom_call.1} parent=67 // pred_region
          %779 = dma.done %s772, 64
        $region92: #{tpu_custom_call.1} parent=67 // pred_fallthru
          _
        %s780 = sand.u32 %s47, 1
        %s781 = scalar_lea.sflag [#allocation13], %s780
        %s782 = sand.u32 %s255, 1
        %s783 = smul.addr %s782, 4
        %s784 = scalar_lea.vmem [#allocation14], %s783
        // Predicated region
        $region93: #{tpu_custom_call.1} parent=67 // pred_check
          %p785 = pneg %p268
        $region94: #{tpu_custom_call.1} parent=67 // pred_check_branch
          %787 = sbr.rel (%p785) target = $region96
        $region95: #{tpu_custom_call.1} parent=67 // pred_region
          %788 = dma.done %s781, 64
        $region96: #{tpu_custom_call.1} parent=67 // pred_fallthru
          _
        %s789 = sand.u32 %s47, 1
        %s790 = scalar_lea.sflag [#allocation16], %s789
        %s791 = sand.u32 %s285, 1
        %s792 = smul.addr %s791, 4
        %s793 = scalar_lea.vmem [#allocation15], %s792
        // Predicated region
        $region97: #{tpu_custom_call.1} parent=67 // pred_check
          %p794 = pneg %p298
        $region98: #{tpu_custom_call.1} parent=67 // pred_check_branch
          %796 = sbr.rel (%p794) target = $region100
        $region99: #{tpu_custom_call.1} parent=67 // pred_region
          %797 = dma.done %s790, 64
        $region100: #{tpu_custom_call.1} parent=67 // pred_fallthru
          _
        %s798 = sand.u32 %s47, 1
        %s799 = scalar_lea.sflag [#allocation16], %s798
        %s800 = sand.u32 %s315, 1
        %s801 = smul.addr %s800, 4
        %s802 = scalar_lea.vmem [#allocation17], %s801
        // Predicated region
        $region101: #{tpu_custom_call.1} parent=67 // pred_check
          %p803 = pneg %p328
        $region102: #{tpu_custom_call.1} parent=67 // pred_check_branch
          %805 = sbr.rel (%p803) target = $region104
        $region103: #{tpu_custom_call.1} parent=67 // pred_region
          %806 = dma.done %s799, 64
        $region104: #{tpu_custom_call.1} parent=67 // pred_fallthru
          _
        %s807 = sand.u32 %s47, 1
        %s808 = scalar_lea.sflag [#allocation19], %s807
        %s809 = sand.u32 %s345, 1
        %s810 = smul.addr %s809, 4
        %s811 = scalar_lea.vmem [#allocation18], %s810
        // Predicated region
        $region105: #{tpu_custom_call.1} parent=67 // pred_check
          %p812 = pneg %p358
        $region106: #{tpu_custom_call.1} parent=67 // pred_check_branch
          %814 = sbr.rel (%p812) target = $region108
        $region107: #{tpu_custom_call.1} parent=67 // pred_region
          %815 = dma.done %s808, 64
        $region108: #{tpu_custom_call.1} parent=67 // pred_fallthru
          _
        %s816 = sand.u32 %s47, 1
        %s817 = scalar_lea.sflag [#allocation19], %s816
        %s818 = sand.u32 %s375, 1
        %s819 = smul.addr %s818, 4
        %s820 = scalar_lea.vmem [#allocation20], %s819
        // Predicated region
        $region109: #{tpu_custom_call.1} parent=67 // pred_check
          %p821 = pneg %p388
        $region110: #{tpu_custom_call.1} parent=67 // pred_check_branch
          %823 = sbr.rel (%p821) target = $region112
        $region111: #{tpu_custom_call.1} parent=67 // pred_region
          %824 = dma.done %s817, 64
        $region112: #{tpu_custom_call.1} parent=67 // pred_fallthru
          _
        %s825 = sand.u32 %s405, 1
        %s826 = scalar_lea.sflag [#allocation22], %s825
        %s827 = sand.u32 %s405, 1
        %s828 = smul.addr %s827, 4
        %s829 = scalar_lea.vmem [#allocation21], %s828
        // Predicated region
        $region113: #{tpu_custom_call.1} parent=67 // pred_check
          %p830 = pneg %p418
        $region114: #{tpu_custom_call.1} parent=67 // pred_check_branch
          %832 = sbr.rel (%p830) target = $region116
        $region115: #{tpu_custom_call.1} parent=67 // pred_region
          %833 = dma.done %s826, 64
        $region116: #{tpu_custom_call.1} parent=67 // pred_fallthru
          _
        %s834 = sand.u32 %s75, 1
        %s835 = scalar_lea.sflag [#allocation4], %s834
        %s836 = sand.u32 %s75, 1
        %s837 = smul.addr %s836, 4
        %s838 = scalar_lea.vmem [#allocation3], %s837
        %p839 = pneg %p88
        %p840 = pneg %p85
        %s841 = sand.u32 %s47, 1
        %s842 = scalar_lea.sflag [#allocation7], %s841
        %s843 = sand.u32 %s103, 1
        %s844 = smul.addr %s843, 4
        %s845 = scalar_lea.vmem [#allocation6], %s844
        %p846 = pneg %p116
        %p847 = pneg %p113
        %s848 = sand.u32 %s47, 1
        %s849 = scalar_lea.sflag [#allocation7], %s848
        %s850 = sand.u32 %s137, 1
        %s851 = smul.addr %s850, 4
        %s852 = scalar_lea.vmem [#allocation8], %s851
        %p853 = pneg %p150
        %p854 = pneg %p147
        %s855 = sand.u32 %s47, 1
        %s856 = scalar_lea.sflag [#allocation10], %s855
        %s857 = sand.u32 %s165, 1
        %s858 = smul.addr %s857, 4
        %s859 = scalar_lea.vmem [#allocation9], %s858
        %p860 = pneg %p178
        %p861 = pneg %p175
        %s862 = sand.u32 %s47, 1
        %s863 = scalar_lea.sflag [#allocation10], %s862
        %s864 = sand.u32 %s195, 1
        %s865 = smul.addr %s864, 4
        %s866 = scalar_lea.vmem [#allocation11], %s865
        %p867 = pneg %p208
        %p868 = pneg %p205
        %s869 = sand.u32 %s47, 1
        %s870 = scalar_lea.sflag [#allocation13], %s869
        %s871 = sand.u32 %s225, 1
        %s872 = smul.addr %s871, 4
        %s873 = scalar_lea.vmem [#allocation12], %s872
        %p874 = pneg %p238
        %p875 = pneg %p235
        %s876 = sand.u32 %s47, 1
        %s877 = scalar_lea.sflag [#allocation13], %s876
        %s878 = sand.u32 %s255, 1
        %s879 = smul.addr %s878, 4
        %s880 = scalar_lea.vmem [#allocation14], %s879
        %p881 = pneg %p268
        %p882 = pneg %p265
        %s883 = sand.u32 %s47, 1
        %s884 = scalar_lea.sflag [#allocation16], %s883
        %s885 = sand.u32 %s285, 1
        %s886 = smul.addr %s885, 4
        %s887 = scalar_lea.vmem [#allocation15], %s886
        %p888 = pneg %p298
        %p889 = pneg %p295
        %s890 = sand.u32 %s47, 1
        %s891 = scalar_lea.sflag [#allocation16], %s890
        %s892 = sand.u32 %s315, 1
        %s893 = smul.addr %s892, 4
        %s894 = scalar_lea.vmem [#allocation17], %s893
        %p895 = pneg %p328
        %p896 = pneg %p325
        %s897 = sand.u32 %s47, 1
        %s898 = scalar_lea.sflag [#allocation19], %s897
        %s899 = sand.u32 %s345, 1
        %s900 = smul.addr %s899, 4
        %s901 = scalar_lea.vmem [#allocation18], %s900
        %p902 = pneg %p358
        %p903 = pneg %p355
        %s904 = sand.u32 %s47, 1
        %s905 = scalar_lea.sflag [#allocation19], %s904
        %s906 = sand.u32 %s375, 1
        %s907 = smul.addr %s906, 4
        %s908 = scalar_lea.vmem [#allocation20], %s907
        %p909 = pneg %p388
        %p910 = pneg %p385
        %s911 = sand.u32 %s405, 1
        %s912 = scalar_lea.sflag [#allocation22], %s911
        %s913 = sand.u32 %s405, 1
        %s914 = smul.addr %s913, 4
        %s915 = scalar_lea.vmem [#allocation21], %s914
        %p916 = pneg %p418
        %p917 = pneg %p415
        %p918 = pneg %p446
        %p919 = pneg %p443
        %s920 = sand.u32 %s433, 1
        %s921 = scalar_lea.sflag [#allocation5], %s920
        %s922 = sand.u32 %s433, 1
        %s923 = smul.addr %s922, 4
        %s924 = scalar_lea.vmem [#allocation23], %s923
        %s925 = ssub.s32 %s52, 1
        %p926 = scmp.gt.s32.totalorder %s925, 0
        %s927 = scalar_select %p926, %s925, 0
        %s928 = sadd.s32 %s52, 1
        %p929 = scmp.lt.s32.totalorder %s928, 1
        %s930 = scalar_select %p929, %s928, 1
        %s931 = sadd.s32 %s52, 2
        %s932 = sadd.s32 %s52, 4
        %s933 = sadd.s32 %s52, 6
        %s934 = sadd.s32 %s52, 8
        %s935 = sadd.s32 %s52, 10
        %s936 = sadd.s32 %s52, 12
        %s937 = sadd.s32 %s52, 14
        %s938 = sadd.s32 %s52, 16
        %v939 = vld [vmem:[%s730] sm:$0xf]
        %940 = vst [vmem:[#allocation2] sm:$0xf] %v939
        %v941 = vld [vmem:[%s739] sm:$0xf]
        %942 = vst [vmem:[#allocation2 + $0x4] sm:$0xf] %v941
        %v943 = vld [vmem:[%s748] sm:$0xf]
        %944 = vst [vmem:[#allocation2 + $0x8] sm:$0xf] %v943
        %v945 = vld [vmem:[#allocation2] sm:$0xff]
        %v946 = vld [vmem:[#allocation2 + $0x8] sm:$0xf]
        %v947 = vlaneseq
        %v948 = vand.u32 %v947, 127
        %v949 = vadd.s32 %v948, 128
        %v950 = vadd.s32 %v948, 256
        %vm951 = vcmp.lt.s32.totalorder %v948, 0
        %v952 = vsub.s32 0, %v948
        %v953 = vsel %vm951, %v952, %v948
        %v954 = vshrl.u32 %v953, 4
        %v955 = vand.u32 %v953, 15
        %v956 = vsub.s32 0, %v955
        %v957 = vsel %vm951, %v956, %v955
        %vm958 = vcmp.lt.s32.totalorder %v949, 0
        %v959 = vsub.s32 0, %v949
        %v960 = vsel %vm958, %v959, %v949
        %v961 = vshrl.u32 %v960, 4
        %v962 = vand.u32 %v960, 15
        %v963 = vsub.s32 0, %v962
        %v964 = vsel %vm958, %v963, %v962
        %vm965 = vcmp.lt.s32.totalorder %v950, 0
        %v966 = vsub.s32 0, %v950
        %v967 = vsel %vm965, %v966, %v950
        %v968 = vshrl.u32 %v967, 4
        %v969 = vand.u32 %v967, 15
        %v970 = vsub.s32 0, %v969
        %v971 = vsel %vm965, %v970, %v969
        %vm972 = vcmp.ne.s32.totalorder %v957, 0
        %vm973 = vcmp.ne.s32.totalorder %v964, 0
        %vm974 = vcmp.ne.s32.totalorder %v971, 0
        %vm975 = vcmp.lt.s32.totalorder %v957, 0
        %vm976 = vcmp.lt.s32.totalorder %v964, 0
        %vm977 = vcmp.lt.s32.totalorder %v971, 0
        %vm978 = vmand %vm975, %vm972
        %vm979 = vmand %vm976, %vm973
        %vm980 = vmand %vm977, %vm974
        %v981 = vadd.s32 %v957, 16
        %v982 = vadd.s32 %v964, 16
        %v983 = vadd.s32 %v971, 16
        %v984 = vsel %vm978, %v981, %v957
        %v985 = vsel %vm979, %v982, %v964
        %v986 = vsel %vm980, %v983, %v971
        %v989 = vcombine.high %v945, %v945
        %991 = vrot.lane.b32.xlu0 %v945, 1
        %v992 = vpop.permute.xlu0 %991
        %993 = vrot.lane.b32.xlu0 %v989, 1
        %v994 = vpop.permute.xlu0 %993
        %995 = vrot.lane.b32.xlu0 %v946, 1
        %v996 = vpop.permute.xlu0 %995
        %vm997 = vcmp.lt.s32.totalorder %v948, 1
        %v998 = vsel %vm997, %v994, %v996
        %v999 = vsel %vm997, %v992, %v994
        %v1000 = vsel %vm997, %v996, %v992
        %vm1001 = vcmp.ge.s32.totalorder %v984, 1
        %vm1002 = vcmp.ge.s32.totalorder %v985, 1
        %vm1003 = vcmp.ge.s32.totalorder %v986, 1
        %v1004 = vsel %vm1001, 1, 0
        %v1005 = vsel %vm1002, 1, 0
        %v1006 = vsel %vm1003, 1, 0
        %vm1007 = vcmp.eq.s32.totalorder %v1004, 1
        %vm1008 = vcmp.eq.s32.totalorder %v1005, 1
        %vm1009 = vcmp.eq.s32.totalorder %v1006, 1
        %v1010 = vsel %vm1007, %v1000, 0.0
        %v1011 = vsel %vm1008, %v999, 0.0
        %v1012 = vsel %vm1009, %v998, 0.0
        %1013 = vrot.lane.b32.xlu0 %v945, 127
        %v1014 = vpop.permute.xlu0 %1013
        %1015 = vrot.lane.b32.xlu0 %v989, 127
        %v1016 = vpop.permute.xlu0 %1015
        %1017 = vrot.lane.b32.xlu0 %v946, 127
        %v1018 = vpop.permute.xlu0 %1017
        %vm1019 = vcmp.lt.s32.totalorder %v948, 127
        %v1020 = vsel %vm1019, %v1016, %v1018
        %v1021 = vsel %vm1019, %v1014, %v1016
        %v1022 = vsel %vm1019, %v1018, %v1014
        %vm1023 = vcmp.lt.s32.totalorder %v984, 15
        %vm1024 = vcmp.lt.s32.totalorder %v985, 15
        %vm1025 = vcmp.lt.s32.totalorder %v986, 15
        %v1026 = vsel %vm1023, 1, 0
        %v1027 = vsel %vm1024, 1, 0
        %v1028 = vsel %vm1025, 1, 0
        %vm1029 = vcmp.eq.s32.totalorder %v1026, 1
        %vm1030 = vcmp.eq.s32.totalorder %v1027, 1
        %vm1031 = vcmp.eq.s32.totalorder %v1028, 1
        %v1032 = vsel %vm1029, %v1021, 0.0
        %v1033 = vsel %vm1030, %v1020, 0.0
        %v1034 = vsel %vm1031, %v1022, 0.0
        %p1035 = scmp.gt.s32.totalorder %s52, 0
        %vm1036 = vcmp.ge.s32.totalorder %v948, 16
        %s1037 = scalar_select %p1035, 1, 0
        %v1038 = vstv %s1037
        %vm1039 = vcmp.eq.s32.totalorder %v1038, 1
        %vm1040 = vmor %vm1039, %vm1036
        %p1041 = scmp.lt.s32.totalorder %s52, 1
        %vm1042 = vcmp.lt.s32.totalorder %v948, 112
        %s1043 = scalar_select %p1041, 1, 0
        %v1044 = vstv %s1043
        %vm1045 = vcmp.eq.s32.totalorder %v1044, 1
        %vm1046 = vmor %vm1045, %vm1042
        %v1047 = vld [vmem:[%s757] sm:$0xf]
        %1049 = vrot.lane.b32.xlu0 %v1047, 112
        %v1050 = vpop.permute.xlu0 %1049
        %v1052 = vmul.f32 %v1010, %v1050
        %v1053 = vmul.f32 %v1011, %v1050
        %v1054 = vadd.f32 %v1052, 0.0
        %v1055 = vadd.f32 %v1053, 0.0
        %v1056 = vld [vmem:[%s766] sm:$0xf]
        %1058 = vrot.lane.b32.xlu0 %v1056, 112
        %v1059 = vpop.permute.xlu0 %1058
        %v1060 = vrot.slane %v1059, 4
        %vm1061 = vcmask 916480
        %v1062 = vsel %vm1061, %v1060, %v1059
        %v1064 = vmul.f32 %v945, %v1062
        %v1066 = vcombine.high %v1064, %v1064
        %v1068 = vadd.f32 %v1054, %v1064
        %v1069 = vadd.f32 %v1055, %v1066
        %v1070 = vld [vmem:[%s775] sm:$0xf]
        %1072 = vrot.lane.b32.xlu0 %v1070, 112
        %v1073 = vpop.permute.xlu0 %1072
        %v1075 = vmul.f32 %v1032, %v1073
        %v1076 = vmul.f32 %v1033, %v1073
        %v1077 = vadd.f32 %v1068, %v1075
        %v1078 = vadd.f32 %v1069, %v1076
        %v1079 = vsel %vm1040, 1, 0
        %vm1080 = vcmp.eq.s32.totalorder %v1079, 1
        %1083 = vrot.lane.b32.xlu0 %v1077, 16
        %v1084 = vpop.permute.xlu0 %1083
        %1085 = vrot.lane.b32.xlu0 %v1078, 16
        %v1086 = vpop.permute.xlu0 %1085
        %vm1087 = vcmask 130048
        %v1088 = vsel %vm1087, %v1084, %v1086
        %v1090 = vsel %vm1080, %v1088, 0.0
        %v1091 = vadd.f32 %v1090, 0.0
        %v1092 = vld [vmem:[%s784] sm:$0xf]
        %v1093 = vmul.f32 %v1011, %v1092
        %v1094 = vadd.f32 %v1093, 0.0
        %v1095 = vld [vmem:[%s793] sm:$0xf]
        %v1096 = vrot.slane %v945, 4
        %v1098 = vmul.f32 %v1096, %v1095
        %v1099 = vadd.f32 %v1094, %v1098
        %v1100 = vld [vmem:[%s802] sm:$0xf]
        %v1101 = vmul.f32 %v1033, %v1100
        %v1102 = vadd.f32 %v1099, %v1101
        %v1103 = vadd.f32 %v1091, %v1102
        %v1104 = vld [vmem:[%s811] sm:$0xf]
        %1106 = vrot.lane.b32.xlu0 %v1104, 16
        %v1107 = vpop.permute.xlu0 %1106
        %v1109 = vmul.f32 %v1011, %v1107
        %v1110 = vmul.f32 %v1012, %v1107
        %v1111 = vadd.f32 %v1109, 0.0
        %v1112 = vadd.f32 %v1110, 0.0
        %v1113 = vld [vmem:[%s820] sm:$0xf]
        %1114 = vrot.lane.b32.xlu0 %v945, 112
        %v1115 = vpop.permute.xlu0 %1114
        %1116 = vrot.lane.b32.xlu0 %v946, 112
        %v1117 = vpop.permute.xlu0 %1116
        %v1118 = vrot.slane %v1115, 4
        %v1119 = vsel %vm1061, %v1118, %v1117
        %v1121 = vmul.f32 %v1119, %v1113
        %1123 = vrot.lane.b32.xlu0 %v1121, 16
        %v1124 = vpop.permute.xlu0 %1123
        %v1126 = vadd.f32 %v1111, %v1124
        %v1127 = vadd.f32 %v1112, %v1124
        %v1128 = vld [vmem:[%s829] sm:$0xf]
        %1130 = vrot.lane.b32.xlu0 %v1128, 16
        %v1131 = vpop.permute.xlu0 %1130
        %v1133 = vmul.f32 %v1033, %v1131
        %v1134 = vmul.f32 %v1034, %v1131
        %v1135 = vadd.f32 %v1126, %v1133
        %v1136 = vadd.f32 %v1127, %v1134
        %v1137 = vsel %vm1046, 1, 0
        %vm1138 = vcmp.eq.s32.totalorder %v1137, 1
        %1141 = vrot.lane.b32.xlu0 %v1135, 112
        %v1142 = vpop.permute.xlu0 %1141
        %1143 = vrot.lane.b32.xlu0 %v1136, 112
        %v1144 = vpop.permute.xlu0 %1143
        %v1145 = vsel %vm1061, %v1142, %v1144
        %v1147 = vsel %vm1138, %v1145, 0.0
        %v1148 = vadd.f32 %v1103, %v1147
        %1149 = vst [vmem:[%s924] sm:$0xf] %v1148
        %s1150 = sand.u32 %s433, 1
        %s1151 = scalar_lea.sflag [#allocation5], %s1150
        %s1152 = sand.u32 %s433, 1
        %s1153 = smul.addr %s1152, 4
        %s1154 = scalar_lea.vmem [#allocation23], %s1153
        // Predicated region
        $region117: #{tpu_custom_call.1} parent=67 // pred_check
          %p1155 = pneg %p443
        $region118: #{tpu_custom_call.1} parent=67 // pred_check_branch
          %1157 = sbr.rel (%p1155) target = $region120
        $region119: #{tpu_custom_call.1} parent=67 // pred_region
          %s1159 = ssub.s32 64, 64
          %1160 = vsyncadd %s1151, %s1159
          %s1161 = smul.addr %s51, 2
          %s1162 = sadd.s32 %s52, %s1161
          %s1163 = smul.addr %s1162, 64
          %s1164 = scalar_lea.hbm %s12, %s1163
          %s1166 = sshll.u32 %s1154, 4
          %s1167 = int_to_ptr.vmem [resolvable:$true] %s1166
          %1169 = dma.vmem_to_hbm [thread:$0]  %s1167, 64, %s1164, %s1151
        $region120: #{tpu_custom_call.1} parent=67 // pred_fallthru
          _
      $region68: #{tpu_custom_call.1} parent=5 // pred_fallthru
        _
      %p1170 = scmp.le.s32.totalorder 2, %s42
      // Predicated region
      $region121: #{tpu_custom_call.1} parent=5 // pred_check
        %p1171 = pneg %p1170
      $region122: #{tpu_custom_call.1} parent=5 // pred_check_branch
        %1173 = sbr.rel (%p1171) target = $region124
      $region123: #{tpu_custom_call.1} parent=5 // pred_region
        %s1174 = ssub.s32 %s42, 2
        // Predicated region
        $region125: #{tpu_custom_call.1} parent=123 // pred_check
          %p1175 = pneg %p449
        $region126: #{tpu_custom_call.1} parent=123 // pred_check_branch
          %1177 = sbr.rel (%p1175) target = $region128
        $region127: #{tpu_custom_call.1} parent=123 // pred_region
          %s1178 = sand.u32 %s434, 1
          %s1179 = scalar_lea.sflag [#allocation5], %s1178
          %s1180 = sand.u32 %s434, 1
          %s1181 = smul.addr %s1180, 4
          %s1182 = scalar_lea.vmem [#allocation23], %s1181
          %1183 = dma.done %s1179, 64
        $region128: #{tpu_custom_call.1} parent=123 // pred_fallthru
          _
      $region124: #{tpu_custom_call.1} parent=5 // pred_fallthru
        _
    $region6: #{tpu_custom_call.1} parent=1 // loop_footer
      %s46 = sadd.s32 1, %s42
    $region7: #{tpu_custom_call.1} parent=1 // loop_footer_branch
      %41 = sbr.rel target = $region3
    $region8: #{tpu_custom_call.1} parent=1 // loop_exit
      _
    %1184 = vsyncpa [#allocation4], 1
    %s1185 = scalar_lea.sflag [#allocation4], 1
    %1186 = vsyncpa %s1185, 1
    %1187 = vsyncpa [#allocation7], 1
    %s1188 = scalar_lea.sflag [#allocation7], 1
    %1189 = vsyncpa %s1188, 1
    %1190 = vsyncpa [#allocation10], 1
    %s1191 = scalar_lea.sflag [#allocation10], 1
    %1192 = vsyncpa %s1191, 1
    %1193 = vsyncpa [#allocation13], 1
    %s1194 = scalar_lea.sflag [#allocation13], 1
    %1195 = vsyncpa %s1194, 1
    %1196 = vsyncpa [#allocation16], 1
    %s1197 = scalar_lea.sflag [#allocation16], 1
    %1198 = vsyncpa %s1197, 1
    %1199 = vsyncpa [#allocation19], 1
    %s1200 = scalar_lea.sflag [#allocation19], 1
    %1201 = vsyncpa %s1200, 1
    %1202 = vsyncpa [#allocation22], 1
    %s1203 = scalar_lea.sflag [#allocation22], 1
    %1204 = vsyncpa %s1203, 1
    %1205 = vsyncpa [#allocation5], 1
    %s1206 = scalar_lea.sflag [#allocation5], 1
    %1207 = vsyncpa %s1206, 1

</llo_original>
